<compile_context>
chip_gen: v6e
topology: v6e:2x2x1
jax: 0.10.0
libtpu: 0.0.40
codegen_flags: <defaults>
</compile_context>

<pallas_src>
import math

import jax
import jax.numpy as jnp
from jax import lax
from jax.experimental import pallas as pl
from jax.experimental.pallas import tpu as pltpu


_SQRT_2_OVER_PI = 0.7978845608028654


def _gelu_tanh(x):
    # TODO(synk): PyTorch nn.GELU() defaults to the exact (erf) form; the tanh
    # approximation (max abs diff ~1e-3) is used since erf lowering is not guaranteed
    # on Mosaic.  The in-script reference uses the same approximation.
    return 0.5 * x * (1.0 + jnp.tanh(_SQRT_2_OVER_PI * (x + 0.044715 * x * x * x)))


def _features_kernel(dyn_ref, sta_ref, h0_ref, c0_ref,
                     wih_ref, whh_ref, b_ref,
                     w1_ref, b1_ref, w2_ref, b2_ref,
                     out_ref, hN_ref, cN_ref,
                     h_s, c_s, gx_s, hs_s):
    H = h_s.shape[-1]
    T = dyn_ref.shape[0]
    sout = b2_ref.shape[-1]

    # Initialize the recurrent carry from (h0, c0) on the first sequence tile.
    @pl.when(pl.program_id(0) == 0)
    def _init():
        h_s[...] = h0_ref[...].astype(jnp.float32)
        c_s[...] = c0_ref[...].astype(jnp.float32)

    # ---- static-feature MLP: all T timesteps of this tile in two fat matmuls ----
    z = jnp.dot(sta_ref[...].astype(jnp.float32), w1_ref[...],
                preferred_element_type=jnp.float32) + b1_ref[...]
    z = _gelu_tanh(z)
    z = jnp.dot(z, w2_ref[...], preferred_element_type=jnp.float32) + b2_ref[...]
    z = _gelu_tanh(z)

    # ---- LSTM input projection for all T timesteps at once (not recurrent) ----
    gx_s[...] = jnp.dot(dyn_ref[...].astype(jnp.float32), wih_ref[...],
                        preferred_element_type=jnp.float32) + b_ref[...]

    whh = whh_ref[...]

    def step(t, carry):
        h, c = carry
        gates = gx_s[pl.ds(t, 1), :] + jnp.dot(h, whh,
                                               preferred_element_type=jnp.float32)
        i = jax.nn.sigmoid(gates[:, 0:H])
        f = jax.nn.sigmoid(gates[:, H:2 * H])
        g = jnp.tanh(gates[:, 2 * H:3 * H])
        o = jax.nn.sigmoid(gates[:, 3 * H:4 * H])
        c = f * c + i * g
        h = o * jnp.tanh(c)
        hs_s[pl.ds(t, 1), :] = h           # per-row store to aligned (T, H) scratch
        return (h, c)

    unroll = True if T <= 32 else 8
    h, c = lax.fori_loop(0, T, step, (h_s[...], c_s[...]), unroll=unroll)

    # Two bulk column stores into the output tile (instead of T+1 small ones).
    out_ref[:, pl.ds(0, H)] = hs_s[...].astype(out_ref.dtype)
    out_ref[:, pl.ds(H, sout)] = z.astype(out_ref.dtype)

    # Carry for the next sequence tile + exported final state (mirrors self.hidden).
    h_s[...] = h
    c_s[...] = c
    hN_ref[...] = h.astype(hN_ref.dtype)
    cN_ref[...] = c.astype(cN_ref.dtype)


def features_forward(input_seq, params, h0=None, c0=None, *, seq_tile=None):
    """Pallas forward pass for Features (batch_size == 1).

    input_seq: (seq, input_dim) or (1, seq, input_dim) float32.
    params: PyTorch-layout parameter dict (see make_params).
    Returns (s_d, (h_N, c_N)) with s_d of shape (1, seq, hidden_dim + static_output_dim).
    """
    if input_seq.ndim == 3:
        # TODO(synk): batch_size > 1 relies on PyTorch's .view() row reinterleaving and a
        # (1,1,H) hidden state; only the well-defined batch=1 path is implemented.
        assert input_seq.shape[0] == 1, "only batch_size == 1 is supported"
        x2d = input_seq[0]
    else:
        x2d = input_seq
    S, input_dim = x2d.shape

    mlp_hidden, static_in = params['w1'].shape
    static_out = params['w2'].shape[0]
    H = params['w_hh'].shape[1]
    dyn_dim = input_dim - static_in
    assert dyn_dim > 0, "input_dim must exceed static_input_dim"
    out_dim = H + static_out

    dynamic = x2d[:, :dyn_dim]
    static = x2d[:, dyn_dim:]

    if h0 is None:
        h0 = jnp.zeros((1, H), jnp.float32)
    if c0 is None:
        c0 = jnp.zeros((1, H), jnp.float32)
    h0 = h0.reshape(1, H).astype(jnp.float32)
    c0 = c0.reshape(1, H).astype(jnp.float32)

    # Kernel-friendly layouts: [in, out] weights, [1, out] biases, fused LSTM bias.
    wih_t = params['w_ih'].T                          # (dyn, 4H)
    whh_t = params['w_hh'].T                          # (H, 4H)
    b_lstm = (params['b_ih'] + params['b_hh']).reshape(1, 4 * H)
    w1_t = params['w1'].T                             # (static_in, mlp_hidden)
    b1 = params['b1'].reshape(1, mlp_hidden)
    w2_t = params['w2'].T                             # (mlp_hidden, static_out)
    b2 = params['b2'].reshape(1, static_out)

    if seq_tile is None:
        seq_tile = S                                  # one fat grid step by default
    assert S % seq_tile == 0
    assert seq_tile == S or seq_tile % 8 == 0, "partial seq tiles must be multiples of 8"
    grid = (S // seq_tile,)

    const = lambda i: (0, 0)
    in_specs = [
        pl.BlockSpec((seq_tile, dyn_dim), lambda i: (i, 0)),
        pl.BlockSpec((seq_tile, static_in), lambda i: (i, 0)),
        pl.BlockSpec((1, H), const),
        pl.BlockSpec((1, H), const),
        pl.BlockSpec((dyn_dim, 4 * H), const),
        pl.BlockSpec((H, 4 * H), const),
        pl.BlockSpec((1, 4 * H), const),
        pl.BlockSpec((static_in, mlp_hidden), const),
        pl.BlockSpec((1, mlp_hidden), const),
        pl.BlockSpec((mlp_hidden, static_out), const),
        pl.BlockSpec((1, static_out), const),
    ]
    out_specs = [
        pl.BlockSpec((seq_tile, out_dim), lambda i: (i, 0)),
        pl.BlockSpec((1, H), const),
        pl.BlockSpec((1, H), const),
    ]
    out_shape = [
        jax.ShapeDtypeStruct((S, out_dim), x2d.dtype),
        jax.ShapeDtypeStruct((1, H), jnp.float32),
        jax.ShapeDtypeStruct((1, H), jnp.float32),
    ]
    scratch_shapes = [
        pltpu.VMEM((1, H), jnp.float32),              # h carry across seq tiles
        pltpu.VMEM((1, H), jnp.float32),              # c carry across seq tiles
        pltpu.VMEM((seq_tile, 4 * H), jnp.float32),   # precomputed x @ W_ih^T + b
        pltpu.VMEM((seq_tile, H), jnp.float32),       # per-tile hidden-state rows
    ]

    # Explicit VMEM budget: double-buffered I/O tiles + weights + scratch, with headroom.
    f32 = 4
    io_bytes = 2 * seq_tile * (dyn_dim + static_in + out_dim) * f32
    w_bytes = (dyn_dim * 4 * H + H * 4 * H + 4 * H + static_in * mlp_hidden
               + mlp_hidden + mlp_hidden * static_out + static_out + 4 * H) * f32
    scratch_bytes = (2 * H + seq_tile * 4 * H + seq_tile * H) * f32
    vmem_limit = int(min(32 * 1024 * 1024,
                         max(8 * 1024 * 1024,
                             4 * (io_bytes + 2 * w_bytes + scratch_bytes))))

    out2d, h_n, c_n = pl.pallas_call(
        _features_kernel,
        out_shape=out_shape,
        grid_spec=pltpu.PrefetchScalarGridSpec(
            num_scalar_prefetch=0,
            grid=grid,
            in_specs=in_specs,
            out_specs=out_specs,
            scratch_shapes=scratch_shapes,
        ),
        compiler_params=pltpu.CompilerParams(
            dimension_semantics=("arbitrary",),       # h/c recurrence across seq tiles
            vmem_limit_bytes=vmem_limit,
        ),
    )(dynamic, static, h0, c0, wih_t, whh_t, b_lstm, w1_t, b1, w2_t, b2)

    return out2d.reshape(1, S, out_dim), (h_n, c_n)


def make_params(key, *, dyn_dim=3, hidden_dim=64, static_input_dim=16,
                static_output_dim=4, mlp_hidden=32):
    """PyTorch-layout parameters mirroring Features.__init__ default initialization."""
    H = hidden_dim
    ks = jax.random.split(key, 8)

    def u(k, shape, fan_in):
        bound = 1.0 / math.sqrt(fan_in)
        return jax.random.uniform(k, shape, jnp.float32, -bound, bound)

    return {
        'w_ih': u(ks[0], (4 * H, dyn_dim), H),    # nn.LSTM: U(-1/sqrt(H), 1/sqrt(H))
        'w_hh': u(ks[1], (4 * H, H), H),
        'b_ih': u(ks[2], (4 * H,), H),
        'b_hh': u(ks[3], (4 * H,), H),
        'w1':   u(ks[4], (mlp_hidden, static_input_dim), static_input_dim),
        'b1':   u(ks[5], (mlp_hidden,), static_input_dim),
        'w2':   u(ks[6], (static_output_dim, mlp_hidden), mlp_hidden),
        'b2':   u(ks[7], (static_output_dim,), mlp_hidden),
    }


def reference_forward(input_seq, params, h0=None, c0=None):
    """Pure-JAX reference mirroring Features.forward (batch=1, same GELU approximation)."""
    x2d = input_seq[0] if input_seq.ndim == 3 else input_seq
    S, input_dim = x2d.shape
    static_in = params['w1'].shape[1]
    dyn_dim = input_dim - static_in
    H = params['w_hh'].shape[1]

    dynamic = x2d[:, :dyn_dim]
    static = x2d[:, dyn_dim:]

    if h0 is None:
        h0 = jnp.zeros((1, H), jnp.float32)
    if c0 is None:
        c0 = jnp.zeros((1, H), jnp.float32)

    wih, whh = params['w_ih'], params['w_hh']
    b = params['b_ih'] + params['b_hh']

    def cell(carry, x_t):
        h, c = carry
        gates = x_t[None, :] @ wih.T + h @ whh.T + b
        i = jax.nn.sigmoid(gates[:, 0:H])
        f = jax.nn.sigmoid(gates[:, H:2 * H])
        g = jnp.tanh(gates[:, 2 * H:3 * H])
        o = jax.nn.sigmoid(gates[:, 3 * H:4 * H])
        c = f * c + i * g
        h = o * jnp.tanh(c)
        return (h, c), h[0]

    (h_n, c_n), hs = lax.scan(cell, (h0, c0), dynamic)

    z = _gelu_tanh(static @ params['w1'].T + params['b1'])
    z = _gelu_tanh(z @ params['w2'].T + params['b2'])

    out = jnp.concatenate([hs, z], axis=-1)
    return out.reshape(1, S, -1), (h_n, c_n)


if __name__ == "__main__":
    seq_len = 8
    dyn_dim = 3
    static_input_dim = 16
    hidden_dim = 64
    static_output_dim = 4
    input_dim = dyn_dim + static_input_dim        # 19 total features per timestep

    key = jax.random.PRNGKey(0)
    key, kp, kx, kx2 = jax.random.split(key, 4)
    params = make_params(kp, dyn_dim=dyn_dim, hidden_dim=hidden_dim,
                         static_input_dim=static_input_dim,
                         static_output_dim=static_output_dim)
    x = jax.random.normal(kx, (seq_len, input_dim), jnp.float32)

    # Single fat tile: whole sequence in one grid step.
    out, (h_n, c_n) = features_forward(x, params)
    out = jax.block_until_ready(out)
    ref, (rh, rc) = reference_forward(x, params)

    assert out.shape == (1, seq_len, hidden_dim + static_output_dim)
    assert jnp.allclose(out, ref, atol=1e-4, rtol=1e-3), "mismatch vs reference (output)"
    assert jnp.allclose(h_n, rh, atol=1e-4, rtol=1e-3), "mismatch vs reference (h_N)"
    assert jnp.allclose(c_n, rc, atol=1e-4, rtol=1e-3), "mismatch vs reference (c_N)"

    # Multi-tile path: h/c carried across grid steps in VMEM scratch.
    x2 = jax.random.normal(kx2, (16, input_dim), jnp.float32)
    out2, (h2, c2) = features_forward(x2, params, seq_tile=8)
    out2 = jax.block_until_ready(out2)
    ref2, (rh2, rc2) = reference_forward(x2, params)
    assert jnp.allclose(out2, ref2, atol=1e-4, rtol=1e-3), "mismatch vs reference (tiled)"
    assert jnp.allclose(h2, rh2, atol=1e-4, rtol=1e-3), "mismatch vs reference (tiled h_N)"
    assert jnp.allclose(c2, rc2, atol=1e-4, rtol=1e-3), "mismatch vs reference (tiled c_N)"

    print("KERNEL_OK")
</pallas_src>

<mosaic_0001>
module attributes {stable_mosaic.version = 11 : i64} {
  func.func @_features_kernel(%arg0: i32, %arg1: memref<8x3xf32, #tpu.memory_space<vmem>>, %arg2: memref<8x16xf32, #tpu.memory_space<vmem>>, %arg3: memref<1x64xf32, #tpu.memory_space<vmem>>, %arg4: memref<1x64xf32, #tpu.memory_space<vmem>>, %arg5: memref<3x256xf32, #tpu.memory_space<vmem>>, %arg6: memref<64x256xf32, #tpu.memory_space<vmem>>, %arg7: memref<1x256xf32, #tpu.memory_space<vmem>>, %arg8: memref<16x32xf32, #tpu.memory_space<vmem>>, %arg9: memref<1x32xf32, #tpu.memory_space<vmem>>, %arg10: memref<32x4xf32, #tpu.memory_space<vmem>>, %arg11: memref<1x4xf32, #tpu.memory_space<vmem>>, %arg12: memref<8x68xf32, #tpu.memory_space<vmem>>, %arg13: memref<1x64xf32, #tpu.memory_space<vmem>>, %arg14: memref<1x64xf32, #tpu.memory_space<vmem>>, %arg15: memref<1x64xf32, #tpu.memory_space<vmem>>, %arg16: memref<1x64xf32, #tpu.memory_space<vmem>>, %arg17: memref<8x256xf32, #tpu.memory_space<vmem>>, %arg18: memref<8x64xf32, #tpu.memory_space<vmem>>) attributes {dimension_semantics = [#tpu.dimension_semantics<arbitrary>], iteration_bounds = array<i64: 1>, scalar_prefetch = 0 : i64, scratch_operands = 4 : i64, tpu.core_type = #tpu.core_type<tc>, window_params = [{transform_indices = @transform_0, window_bounds = array<i64: 8, 3>}, {transform_indices = @transform_1, window_bounds = array<i64: 8, 16>}, {pipeline_mode = #tpu.pipeline_mode<synchronous>, transform_indices = @transform_2, window_bounds = array<i64: 1, 64>}, {pipeline_mode = #tpu.pipeline_mode<synchronous>, transform_indices = @transform_3, window_bounds = array<i64: 1, 64>}, {pipeline_mode = #tpu.pipeline_mode<synchronous>, transform_indices = @transform_4, window_bounds = array<i64: 3, 256>}, {pipeline_mode = #tpu.pipeline_mode<synchronous>, transform_indices = @transform_5, window_bounds = array<i64: 64, 256>}, {pipeline_mode = #tpu.pipeline_mode<synchronous>, transform_indices = @transform_6, window_bounds = array<i64: 1, 256>}, {pipeline_mode = #tpu.pipeline_mode<synchronous>, transform_indices = @transform_7, window_bounds = array<i64: 16, 32>}, {pipeline_mode = #tpu.pipeline_mode<synchronous>, transform_indices = @transform_8, window_bounds = array<i64: 1, 32>}, {pipeline_mode = #tpu.pipeline_mode<synchronous>, transform_indices = @transform_9, window_bounds = array<i64: 32, 4>}, {pipeline_mode = #tpu.pipeline_mode<synchronous>, transform_indices = @transform_10, window_bounds = array<i64: 1, 4>}, {transform_indices = @transform_11, window_bounds = array<i64: 8, 68>}, {pipeline_mode = #tpu.pipeline_mode<synchronous>, transform_indices = @transform_12, window_bounds = array<i64: 1, 64>}, {pipeline_mode = #tpu.pipeline_mode<synchronous>, transform_indices = @transform_13, window_bounds = array<i64: 1, 64>}]} {
    %c0_i32 = arith.constant 0 : i32
    %0 = arith.cmpi eq, %arg0, %c0_i32 : i32
    %1 = arith.extui %0 : i1 to i32
    %c0_i32_0 = arith.constant 0 : i32
    %2 = arith.cmpi ne, %1, %c0_i32_0 : i32
    scf.if %2 {
      %c0_96 = arith.constant 0 : index
      %c0_97 = arith.constant 0 : index
      %305 = vector.load %arg3[%c0_96, %c0_97] : memref<1x64xf32, #tpu.memory_space<vmem>>, vector<1x64xf32>
      %c0_98 = arith.constant 0 : index
      %c0_99 = arith.constant 0 : index
      %306 = vector.load %arg15[%c0_98, %c0_99] : memref<1x64xf32, #tpu.memory_space<vmem>>, vector<1x64xf32>
      tpu.vector_store %arg15[%c0_98, %c0_99], %305 {strides = array<i32>} : memref<1x64xf32, #tpu.memory_space<vmem>>, vector<1x64xf32>,
      %c0_100 = arith.constant 0 : index
      %c0_101 = arith.constant 0 : index
      %307 = vector.load %arg4[%c0_100, %c0_101] : memref<1x64xf32, #tpu.memory_space<vmem>>, vector<1x64xf32>
      %c0_102 = arith.constant 0 : index
      %c0_103 = arith.constant 0 : index
      %308 = vector.load %arg16[%c0_102, %c0_103] : memref<1x64xf32, #tpu.memory_space<vmem>>, vector<1x64xf32>
      tpu.vector_store %arg16[%c0_102, %c0_103], %307 {strides = array<i32>} : memref<1x64xf32, #tpu.memory_space<vmem>>, vector<1x64xf32>,
    } else {
    }
    %c0 = arith.constant 0 : index
    %c0_1 = arith.constant 0 : index
    %3 = vector.load %arg2[%c0, %c0_1] : memref<8x16xf32, #tpu.memory_space<vmem>>, vector<8x16xf32>
    %c0_2 = arith.constant 0 : index
    %c0_3 = arith.constant 0 : index
    %4 = vector.load %arg8[%c0_2, %c0_3] : memref<16x32xf32, #tpu.memory_space<vmem>>, vector<16x32xf32>
    %cst = arith.constant dense<0.000000e+00> : vector<8x32xf32>
    %5 = tpu.matmul %3, %4, %cst {dimension_numbers = #tpu.dot_dimension_numbers<[1], [0], [0], [1], [0, 0, 1, 1], [], []>} : vector<8x16xf32>, vector<16x32xf32>, vector<8x32xf32> -> vector<8x32xf32>
    %c0_4 = arith.constant 0 : index
    %c0_5 = arith.constant 0 : index
    %6 = vector.load %arg9[%c0_4, %c0_5] : memref<1x32xf32, #tpu.memory_space<vmem>>, vector<1x32xf32>
    %7 = vector.broadcast %6 : vector<1x32xf32> to vector<8x32xf32>
    %8 = arith.addf %5, %7 : vector<8x32xf32>
    %cst_6 = arith.constant 5.000000e-01 : f32
    %9 = vector.broadcast %cst_6 : f32 to vector<8x32xf32>
    %10 = arith.mulf %9, %8 : vector<8x32xf32>
    %cst_7 = arith.constant 4.471500e-02 : f32
    %11 = vector.broadcast %cst_7 : f32 to vector<8x32xf32>
    %12 = arith.mulf %11, %8 : vector<8x32xf32>
    %13 = arith.mulf %12, %8 : vector<8x32xf32>
    %14 = arith.mulf %13, %8 : vector<8x32xf32>
    %15 = arith.addf %8, %14 : vector<8x32xf32>
    %cst_8 = arith.constant 0.797884583 : f32
    %16 = vector.broadcast %cst_8 : f32 to vector<8x32xf32>
    %17 = arith.mulf %16, %15 : vector<8x32xf32>
    %18 = math.tanh %17 : vector<8x32xf32>
    %cst_9 = arith.constant 1.000000e+00 : f32
    %19 = vector.broadcast %cst_9 : f32 to vector<8x32xf32>
    %20 = arith.addf %19, %18 : vector<8x32xf32>
    %21 = arith.mulf %10, %20 : vector<8x32xf32>
    %c0_10 = arith.constant 0 : index
    %c0_11 = arith.constant 0 : index
    %22 = vector.load %arg10[%c0_10, %c0_11] : memref<32x4xf32, #tpu.memory_space<vmem>>, vector<32x4xf32>
    %cst_12 = arith.constant dense<0.000000e+00> : vector<8x4xf32>
    %23 = tpu.matmul %21, %22, %cst_12 {dimension_numbers = #tpu.dot_dimension_numbers<[1], [0], [0], [1], [0, 0, 1, 1], [], []>} : vector<8x32xf32>, vector<32x4xf32>, vector<8x4xf32> -> vector<8x4xf32>
    %c0_13 = arith.constant 0 : index
    %c0_14 = arith.constant 0 : index
    %24 = vector.load %arg11[%c0_13, %c0_14] : memref<1x4xf32, #tpu.memory_space<vmem>>, vector<1x4xf32>
    %25 = vector.broadcast %24 : vector<1x4xf32> to vector<8x4xf32>
    %26 = arith.addf %23, %25 : vector<8x4xf32>
    %cst_15 = arith.constant 5.000000e-01 : f32
    %27 = vector.broadcast %cst_15 : f32 to vector<8x4xf32>
    %28 = arith.mulf %27, %26 : vector<8x4xf32>
    %cst_16 = arith.constant 4.471500e-02 : f32
    %29 = vector.broadcast %cst_16 : f32 to vector<8x4xf32>
    %30 = arith.mulf %29, %26 : vector<8x4xf32>
    %31 = arith.mulf %30, %26 : vector<8x4xf32>
    %32 = arith.mulf %31, %26 : vector<8x4xf32>
    %33 = arith.addf %26, %32 : vector<8x4xf32>
    %cst_17 = arith.constant 0.797884583 : f32
    %34 = vector.broadcast %cst_17 : f32 to vector<8x4xf32>
    %35 = arith.mulf %34, %33 : vector<8x4xf32>
    %36 = math.tanh %35 : vector<8x4xf32>
    %cst_18 = arith.constant 1.000000e+00 : f32
    %37 = vector.broadcast %cst_18 : f32 to vector<8x4xf32>
    %38 = arith.addf %37, %36 : vector<8x4xf32>
    %39 = arith.mulf %28, %38 : vector<8x4xf32>
    %c0_19 = arith.constant 0 : index
    %c0_20 = arith.constant 0 : index
    %40 = vector.load %arg1[%c0_19, %c0_20] : memref<8x3xf32, #tpu.memory_space<vmem>>, vector<8x3xf32>
    %c0_21 = arith.constant 0 : index
    %c0_22 = arith.constant 0 : index
    %41 = vector.load %arg5[%c0_21, %c0_22] : memref<3x256xf32, #tpu.memory_space<vmem>>, vector<3x256xf32>
    %cst_23 = arith.constant dense<0.000000e+00> : vector<8x256xf32>
    %42 = tpu.matmul %40, %41, %cst_23 {dimension_numbers = #tpu.dot_dimension_numbers<[1], [0], [0], [1], [0, 0, 1, 1], [], []>} : vector<8x3xf32>, vector<3x256xf32>, vector<8x256xf32> -> vector<8x256xf32>
    %c0_24 = arith.constant 0 : index
    %c0_25 = arith.constant 0 : index
    %43 = vector.load %arg7[%c0_24, %c0_25] : memref<1x256xf32, #tpu.memory_space<vmem>>, vector<1x256xf32>
    %44 = vector.broadcast %43 : vector<1x256xf32> to vector<8x256xf32>
    %45 = arith.addf %42, %44 : vector<8x256xf32>
    %c0_26 = arith.constant 0 : index
    %c0_27 = arith.constant 0 : index
    %46 = vector.load %arg17[%c0_26, %c0_27] : memref<8x256xf32, #tpu.memory_space<vmem>>, vector<8x256xf32>
    tpu.vector_store %arg17[%c0_26, %c0_27], %45 {strides = array<i32>} : memref<8x256xf32, #tpu.memory_space<vmem>>, vector<8x256xf32>,
    %c0_28 = arith.constant 0 : index
    %c0_29 = arith.constant 0 : index
    %47 = vector.load %arg6[%c0_28, %c0_29] : memref<64x256xf32, #tpu.memory_space<vmem>>, vector<64x256xf32>
    %c0_30 = arith.constant 0 : index
    %c0_31 = arith.constant 0 : index
    %48 = vector.load %arg15[%c0_30, %c0_31] : memref<1x64xf32, #tpu.memory_space<vmem>>, vector<1x64xf32>
    %c0_32 = arith.constant 0 : index
    %c0_33 = arith.constant 0 : index
    %49 = vector.load %arg16[%c0_32, %c0_33] : memref<1x64xf32, #tpu.memory_space<vmem>>, vector<1x64xf32>
    %c0_i32_34 = arith.constant 0 : i32
    %50 = arith.index_cast %c0_i32_34 : i32 to index
    %c0_35 = arith.constant 0 : index
    %51 = vector.load %arg17[%50, %c0_35] : memref<8x256xf32, #tpu.memory_space<vmem>>, vector<1x256xf32>
    %cst_36 = arith.constant dense<0.000000e+00> : vector<1x256xf32>
    %52 = tpu.matmul %48, %47, %cst_36 {dimension_numbers = #tpu.dot_dimension_numbers<[1], [0], [0], [1], [0, 0, 1, 1], [], []>} : vector<1x64xf32>, vector<64x256xf32>, vector<1x256xf32> -> vector<1x256xf32>
    %53 = arith.addf %51, %52 : vector<1x256xf32>
    %54 = vector.extract_strided_slice %53 {offsets = [0, 0], sizes = [1, 64], strides = [1, 1]} : vector<1x256xf32> to vector<1x64xf32>
    %55 = arith.negf %54 : vector<1x64xf32>
    %56 = math.exp %55 : vector<1x64xf32>
    %cst_37 = arith.constant 1.000000e+00 : f32
    %57 = vector.broadcast %cst_37 : f32 to vector<1x64xf32>
    %58 = arith.addf %57, %56 : vector<1x64xf32>
    %59 = arith.divf %57, %58 : vector<1x64xf32>
    %60 = vector.extract_strided_slice %53 {offsets = [0, 64], sizes = [1, 64], strides = [1, 1]} : vector<1x256xf32> to vector<1x64xf32>
    %61 = arith.negf %60 : vector<1x64xf32>
    %62 = math.exp %61 : vector<1x64xf32>
    %cst_38 = arith.constant 1.000000e+00 : f32
    %63 = vector.broadcast %cst_38 : f32 to vector<1x64xf32>
    %64 = arith.addf %63, %62 : vector<1x64xf32>
    %65 = arith.divf %63, %64 : vector<1x64xf32>
    %66 = vector.extract_strided_slice %53 {offsets = [0, 128], sizes = [1, 64], strides = [1, 1]} : vector<1x256xf32> to vector<1x64xf32>
    %67 = math.tanh %66 : vector<1x64xf32>
    %68 = vector.extract_strided_slice %53 {offsets = [0, 192], sizes = [1, 64], strides = [1, 1]} : vector<1x256xf32> to vector<1x64xf32>
    %69 = arith.negf %68 : vector<1x64xf32>
    %70 = math.exp %69 : vector<1x64xf32>
    %cst_39 = arith.constant 1.000000e+00 : f32
    %71 = vector.broadcast %cst_39 : f32 to vector<1x64xf32>
    %72 = arith.addf %71, %70 : vector<1x64xf32>
    %73 = arith.divf %71, %72 : vector<1x64xf32>
    %74 = arith.mulf %65, %49 : vector<1x64xf32>
    %75 = arith.mulf %59, %67 : vector<1x64xf32>
    %76 = arith.addf %74, %75 : vector<1x64xf32>
    %77 = math.tanh %76 : vector<1x64xf32>
    %78 = arith.mulf %73, %77 : vector<1x64xf32>
    %79 = arith.index_cast %c0_i32_34 : i32 to index
    %c0_40 = arith.constant 0 : index
    %80 = vector.load %arg18[%79, %c0_40] : memref<8x64xf32, #tpu.memory_space<vmem>>, vector<1x64xf32>
    tpu.vector_store %arg18[%79, %c0_40], %78 {strides = array<i32>} : memref<8x64xf32, #tpu.memory_space<vmem>>, vector<1x64xf32>,
    %c1_i32 = arith.constant 1 : i32
    %81 = arith.index_cast %c1_i32 : i32 to index
    %c0_41 = arith.constant 0 : index
    %82 = vector.load %arg17[%81, %c0_41] : memref<8x256xf32, #tpu.memory_space<vmem>>, vector<1x256xf32>
    %cst_42 = arith.constant dense<0.000000e+00> : vector<1x256xf32>
    %83 = tpu.matmul %78, %47, %cst_42 {dimension_numbers = #tpu.dot_dimension_numbers<[1], [0], [0], [1], [0, 0, 1, 1], [], []>} : vector<1x64xf32>, vector<64x256xf32>, vector<1x256xf32> -> vector<1x256xf32>
    %84 = arith.addf %82, %83 : vector<1x256xf32>
    %85 = vector.extract_strided_slice %84 {offsets = [0, 0], sizes = [1, 64], strides = [1, 1]} : vector<1x256xf32> to vector<1x64xf32>
    %86 = arith.negf %85 : vector<1x64xf32>
    %87 = math.exp %86 : vector<1x64xf32>
    %cst_43 = arith.constant 1.000000e+00 : f32
    %88 = vector.broadcast %cst_43 : f32 to vector<1x64xf32>
    %89 = arith.addf %88, %87 : vector<1x64xf32>
    %90 = arith.divf %88, %89 : vector<1x64xf32>
    %91 = vector.extract_strided_slice %84 {offsets = [0, 64], sizes = [1, 64], strides = [1, 1]} : vector<1x256xf32> to vector<1x64xf32>
    %92 = arith.negf %91 : vector<1x64xf32>
    %93 = math.exp %92 : vector<1x64xf32>
    %cst_44 = arith.constant 1.000000e+00 : f32
    %94 = vector.broadcast %cst_44 : f32 to vector<1x64xf32>
    %95 = arith.addf %94, %93 : vector<1x64xf32>
    %96 = arith.divf %94, %95 : vector<1x64xf32>
    %97 = vector.extract_strided_slice %84 {offsets = [0, 128], sizes = [1, 64], strides = [1, 1]} : vector<1x256xf32> to vector<1x64xf32>
    %98 = math.tanh %97 : vector<1x64xf32>
    %99 = vector.extract_strided_slice %84 {offsets = [0, 192], sizes = [1, 64], strides = [1, 1]} : vector<1x256xf32> to vector<1x64xf32>
    %100 = arith.negf %99 : vector<1x64xf32>
    %101 = math.exp %100 : vector<1x64xf32>
    %cst_45 = arith.constant 1.000000e+00 : f32
    %102 = vector.broadcast %cst_45 : f32 to vector<1x64xf32>
    %103 = arith.addf %102, %101 : vector<1x64xf32>
    %104 = arith.divf %102, %103 : vector<1x64xf32>
    %105 = arith.mulf %96, %76 : vector<1x64xf32>
    %106 = arith.mulf %90, %98 : vector<1x64xf32>
    %107 = arith.addf %105, %106 : vector<1x64xf32>
    %108 = math.tanh %107 : vector<1x64xf32>
    %109 = arith.mulf %104, %108 : vector<1x64xf32>
    %110 = arith.index_cast %c1_i32 : i32 to index
    %c0_46 = arith.constant 0 : index
    %111 = vector.load %arg18[%110, %c0_46] : memref<8x64xf32, #tpu.memory_space<vmem>>, vector<1x64xf32>
    tpu.vector_store %arg18[%110, %c0_46], %109 {strides = array<i32>} : memref<8x64xf32, #tpu.memory_space<vmem>>, vector<1x64xf32>,
    %c2_i32 = arith.constant 2 : i32
    %112 = arith.index_cast %c2_i32 : i32 to index
    %c0_47 = arith.constant 0 : index
    %113 = vector.load %arg17[%112, %c0_47] : memref<8x256xf32, #tpu.memory_space<vmem>>, vector<1x256xf32>
    %cst_48 = arith.constant dense<0.000000e+00> : vector<1x256xf32>
    %114 = tpu.matmul %109, %47, %cst_48 {dimension_numbers = #tpu.dot_dimension_numbers<[1], [0], [0], [1], [0, 0, 1, 1], [], []>} : vector<1x64xf32>, vector<64x256xf32>, vector<1x256xf32> -> vector<1x256xf32>
    %115 = arith.addf %113, %114 : vector<1x256xf32>
    %116 = vector.extract_strided_slice %115 {offsets = [0, 0], sizes = [1, 64], strides = [1, 1]} : vector<1x256xf32> to vector<1x64xf32>
    %117 = arith.negf %116 : vector<1x64xf32>
    %118 = math.exp %117 : vector<1x64xf32>
    %cst_49 = arith.constant 1.000000e+00 : f32
    %119 = vector.broadcast %cst_49 : f32 to vector<1x64xf32>
    %120 = arith.addf %119, %118 : vector<1x64xf32>
    %121 = arith.divf %119, %120 : vector<1x64xf32>
    %122 = vector.extract_strided_slice %115 {offsets = [0, 64], sizes = [1, 64], strides = [1, 1]} : vector<1x256xf32> to vector<1x64xf32>
    %123 = arith.negf %122 : vector<1x64xf32>
    %124 = math.exp %123 : vector<1x64xf32>
    %cst_50 = arith.constant 1.000000e+00 : f32
    %125 = vector.broadcast %cst_50 : f32 to vector<1x64xf32>
    %126 = arith.addf %125, %124 : vector<1x64xf32>
    %127 = arith.divf %125, %126 : vector<1x64xf32>
    %128 = vector.extract_strided_slice %115 {offsets = [0, 128], sizes = [1, 64], strides = [1, 1]} : vector<1x256xf32> to vector<1x64xf32>
    %129 = math.tanh %128 : vector<1x64xf32>
    %130 = vector.extract_strided_slice %115 {offsets = [0, 192], sizes = [1, 64], strides = [1, 1]} : vector<1x256xf32> to vector<1x64xf32>
    %131 = arith.negf %130 : vector<1x64xf32>
    %132 = math.exp %131 : vector<1x64xf32>
    %cst_51 = arith.constant 1.000000e+00 : f32
    %133 = vector.broadcast %cst_51 : f32 to vector<1x64xf32>
    %134 = arith.addf %133, %132 : vector<1x64xf32>
    %135 = arith.divf %133, %134 : vector<1x64xf32>
    %136 = arith.mulf %127, %107 : vector<1x64xf32>
    %137 = arith.mulf %121, %129 : vector<1x64xf32>
    %138 = arith.addf %136, %137 : vector<1x64xf32>
    %139 = math.tanh %138 : vector<1x64xf32>
    %140 = arith.mulf %135, %139 : vector<1x64xf32>
    %141 = arith.index_cast %c2_i32 : i32 to index
    %c0_52 = arith.constant 0 : index
    %142 = vector.load %arg18[%141, %c0_52] : memref<8x64xf32, #tpu.memory_space<vmem>>, vector<1x64xf32>
    tpu.vector_store %arg18[%141, %c0_52], %140 {strides = array<i32>} : memref<8x64xf32, #tpu.memory_space<vmem>>, vector<1x64xf32>,
    %c3_i32 = arith.constant 3 : i32
    %143 = arith.index_cast %c3_i32 : i32 to index
    %c0_53 = arith.constant 0 : index
    %144 = vector.load %arg17[%143, %c0_53] : memref<8x256xf32, #tpu.memory_space<vmem>>, vector<1x256xf32>
    %cst_54 = arith.constant dense<0.000000e+00> : vector<1x256xf32>
    %145 = tpu.matmul %140, %47, %cst_54 {dimension_numbers = #tpu.dot_dimension_numbers<[1], [0], [0], [1], [0, 0, 1, 1], [], []>} : vector<1x64xf32>, vector<64x256xf32>, vector<1x256xf32> -> vector<1x256xf32>
    %146 = arith.addf %144, %145 : vector<1x256xf32>
    %147 = vector.extract_strided_slice %146 {offsets = [0, 0], sizes = [1, 64], strides = [1, 1]} : vector<1x256xf32> to vector<1x64xf32>
    %148 = arith.negf %147 : vector<1x64xf32>
    %149 = math.exp %148 : vector<1x64xf32>
    %cst_55 = arith.constant 1.000000e+00 : f32
    %150 = vector.broadcast %cst_55 : f32 to vector<1x64xf32>
    %151 = arith.addf %150, %149 : vector<1x64xf32>
    %152 = arith.divf %150, %151 : vector<1x64xf32>
    %153 = vector.extract_strided_slice %146 {offsets = [0, 64], sizes = [1, 64], strides = [1, 1]} : vector<1x256xf32> to vector<1x64xf32>
    %154 = arith.negf %153 : vector<1x64xf32>
    %155 = math.exp %154 : vector<1x64xf32>
    %cst_56 = arith.constant 1.000000e+00 : f32
    %156 = vector.broadcast %cst_56 : f32 to vector<1x64xf32>
    %157 = arith.addf %156, %155 : vector<1x64xf32>
    %158 = arith.divf %156, %157 : vector<1x64xf32>
    %159 = vector.extract_strided_slice %146 {offsets = [0, 128], sizes = [1, 64], strides = [1, 1]} : vector<1x256xf32> to vector<1x64xf32>
    %160 = math.tanh %159 : vector<1x64xf32>
    %161 = vector.extract_strided_slice %146 {offsets = [0, 192], sizes = [1, 64], strides = [1, 1]} : vector<1x256xf32> to vector<1x64xf32>
    %162 = arith.negf %161 : vector<1x64xf32>
    %163 = math.exp %162 : vector<1x64xf32>
    %cst_57 = arith.constant 1.000000e+00 : f32
    %164 = vector.broadcast %cst_57 : f32 to vector<1x64xf32>
    %165 = arith.addf %164, %163 : vector<1x64xf32>
    %166 = arith.divf %164, %165 : vector<1x64xf32>
    %167 = arith.mulf %158, %138 : vector<1x64xf32>
    %168 = arith.mulf %152, %160 : vector<1x64xf32>
    %169 = arith.addf %167, %168 : vector<1x64xf32>
    %170 = math.tanh %169 : vector<1x64xf32>
    %171 = arith.mulf %166, %170 : vector<1x64xf32>
    %172 = arith.index_cast %c3_i32 : i32 to index
    %c0_58 = arith.constant 0 : index
    %173 = vector.load %arg18[%172, %c0_58] : memref<8x64xf32, #tpu.memory_space<vmem>>, vector<1x64xf32>
    tpu.vector_store %arg18[%172, %c0_58], %171 {strides = array<i32>} : memref<8x64xf32, #tpu.memory_space<vmem>>, vector<1x64xf32>,
    %c4_i32 = arith.constant 4 : i32
    %174 = arith.index_cast %c4_i32 : i32 to index
    %c0_59 = arith.constant 0 : index
    %175 = vector.load %arg17[%174, %c0_59] : memref<8x256xf32, #tpu.memory_space<vmem>>, vector<1x256xf32>
    %cst_60 = arith.constant dense<0.000000e+00> : vector<1x256xf32>
    %176 = tpu.matmul %171, %47, %cst_60 {dimension_numbers = #tpu.dot_dimension_numbers<[1], [0], [0], [1], [0, 0, 1, 1], [], []>} : vector<1x64xf32>, vector<64x256xf32>, vector<1x256xf32> -> vector<1x256xf32>
    %177 = arith.addf %175, %176 : vector<1x256xf32>
    %178 = vector.extract_strided_slice %177 {offsets = [0, 0], sizes = [1, 64], strides = [1, 1]} : vector<1x256xf32> to vector<1x64xf32>
    %179 = arith.negf %178 : vector<1x64xf32>
    %180 = math.exp %179 : vector<1x64xf32>
    %cst_61 = arith.constant 1.000000e+00 : f32
    %181 = vector.broadcast %cst_61 : f32 to vector<1x64xf32>
    %182 = arith.addf %181, %180 : vector<1x64xf32>
    %183 = arith.divf %181, %182 : vector<1x64xf32>
    %184 = vector.extract_strided_slice %177 {offsets = [0, 64], sizes = [1, 64], strides = [1, 1]} : vector<1x256xf32> to vector<1x64xf32>
    %185 = arith.negf %184 : vector<1x64xf32>
    %186 = math.exp %185 : vector<1x64xf32>
    %cst_62 = arith.constant 1.000000e+00 : f32
    %187 = vector.broadcast %cst_62 : f32 to vector<1x64xf32>
    %188 = arith.addf %187, %186 : vector<1x64xf32>
    %189 = arith.divf %187, %188 : vector<1x64xf32>
    %190 = vector.extract_strided_slice %177 {offsets = [0, 128], sizes = [1, 64], strides = [1, 1]} : vector<1x256xf32> to vector<1x64xf32>
    %191 = math.tanh %190 : vector<1x64xf32>
    %192 = vector.extract_strided_slice %177 {offsets = [0, 192], sizes = [1, 64], strides = [1, 1]} : vector<1x256xf32> to vector<1x64xf32>
    %193 = arith.negf %192 : vector<1x64xf32>
    %194 = math.exp %193 : vector<1x64xf32>
    %cst_63 = arith.constant 1.000000e+00 : f32
    %195 = vector.broadcast %cst_63 : f32 to vector<1x64xf32>
    %196 = arith.addf %195, %194 : vector<1x64xf32>
    %197 = arith.divf %195, %196 : vector<1x64xf32>
    %198 = arith.mulf %189, %169 : vector<1x64xf32>
    %199 = arith.mulf %183, %191 : vector<1x64xf32>
    %200 = arith.addf %198, %199 : vector<1x64xf32>
    %201 = math.tanh %200 : vector<1x64xf32>
    %202 = arith.mulf %197, %201 : vector<1x64xf32>
    %203 = arith.index_cast %c4_i32 : i32 to index
    %c0_64 = arith.constant 0 : index
    %204 = vector.load %arg18[%203, %c0_64] : memref<8x64xf32, #tpu.memory_space<vmem>>, vector<1x64xf32>
    tpu.vector_store %arg18[%203, %c0_64], %202 {strides = array<i32>} : memref<8x64xf32, #tpu.memory_space<vmem>>, vector<1x64xf32>,
    %c5_i32 = arith.constant 5 : i32
    %205 = arith.index_cast %c5_i32 : i32 to index
    %c0_65 = arith.constant 0 : index
    %206 = vector.load %arg17[%205, %c0_65] : memref<8x256xf32, #tpu.memory_space<vmem>>, vector<1x256xf32>
    %cst_66 = arith.constant dense<0.000000e+00> : vector<1x256xf32>
    %207 = tpu.matmul %202, %47, %cst_66 {dimension_numbers = #tpu.dot_dimension_numbers<[1], [0], [0], [1], [0, 0, 1, 1], [], []>} : vector<1x64xf32>, vector<64x256xf32>, vector<1x256xf32> -> vector<1x256xf32>
    %208 = arith.addf %206, %207 : vector<1x256xf32>
    %209 = vector.extract_strided_slice %208 {offsets = [0, 0], sizes = [1, 64], strides = [1, 1]} : vector<1x256xf32> to vector<1x64xf32>
    %210 = arith.negf %209 : vector<1x64xf32>
    %211 = math.exp %210 : vector<1x64xf32>
    %cst_67 = arith.constant 1.000000e+00 : f32
    %212 = vector.broadcast %cst_67 : f32 to vector<1x64xf32>
    %213 = arith.addf %212, %211 : vector<1x64xf32>
    %214 = arith.divf %212, %213 : vector<1x64xf32>
    %215 = vector.extract_strided_slice %208 {offsets = [0, 64], sizes = [1, 64], strides = [1, 1]} : vector<1x256xf32> to vector<1x64xf32>
    %216 = arith.negf %215 : vector<1x64xf32>
    %217 = math.exp %216 : vector<1x64xf32>
    %cst_68 = arith.constant 1.000000e+00 : f32
    %218 = vector.broadcast %cst_68 : f32 to vector<1x64xf32>
    %219 = arith.addf %218, %217 : vector<1x64xf32>
    %220 = arith.divf %218, %219 : vector<1x64xf32>
    %221 = vector.extract_strided_slice %208 {offsets = [0, 128], sizes = [1, 64], strides = [1, 1]} : vector<1x256xf32> to vector<1x64xf32>
    %222 = math.tanh %221 : vector<1x64xf32>
    %223 = vector.extract_strided_slice %208 {offsets = [0, 192], sizes = [1, 64], strides = [1, 1]} : vector<1x256xf32> to vector<1x64xf32>
    %224 = arith.negf %223 : vector<1x64xf32>
    %225 = math.exp %224 : vector<1x64xf32>
    %cst_69 = arith.constant 1.000000e+00 : f32
    %226 = vector.broadcast %cst_69 : f32 to vector<1x64xf32>
    %227 = arith.addf %226, %225 : vector<1x64xf32>
    %228 = arith.divf %226, %227 : vector<1x64xf32>
    %229 = arith.mulf %220, %200 : vector<1x64xf32>
    %230 = arith.mulf %214, %222 : vector<1x64xf32>
    %231 = arith.addf %229, %230 : vector<1x64xf32>
    %232 = math.tanh %231 : vector<1x64xf32>
    %233 = arith.mulf %228, %232 : vector<1x64xf32>
    %234 = arith.index_cast %c5_i32 : i32 to index
    %c0_70 = arith.constant 0 : index
    %235 = vector.load %arg18[%234, %c0_70] : memref<8x64xf32, #tpu.memory_space<vmem>>, vector<1x64xf32>
    tpu.vector_store %arg18[%234, %c0_70], %233 {strides = array<i32>} : memref<8x64xf32, #tpu.memory_space<vmem>>, vector<1x64xf32>,
    %c6_i32 = arith.constant 6 : i32
    %236 = arith.index_cast %c6_i32 : i32 to index
    %c0_71 = arith.constant 0 : index
    %237 = vector.load %arg17[%236, %c0_71] : memref<8x256xf32, #tpu.memory_space<vmem>>, vector<1x256xf32>
    %cst_72 = arith.constant dense<0.000000e+00> : vector<1x256xf32>
    %238 = tpu.matmul %233, %47, %cst_72 {dimension_numbers = #tpu.dot_dimension_numbers<[1], [0], [0], [1], [0, 0, 1, 1], [], []>} : vector<1x64xf32>, vector<64x256xf32>, vector<1x256xf32> -> vector<1x256xf32>
    %239 = arith.addf %237, %238 : vector<1x256xf32>
    %240 = vector.extract_strided_slice %239 {offsets = [0, 0], sizes = [1, 64], strides = [1, 1]} : vector<1x256xf32> to vector<1x64xf32>
    %241 = arith.negf %240 : vector<1x64xf32>
    %242 = math.exp %241 : vector<1x64xf32>
    %cst_73 = arith.constant 1.000000e+00 : f32
    %243 = vector.broadcast %cst_73 : f32 to vector<1x64xf32>
    %244 = arith.addf %243, %242 : vector<1x64xf32>
    %245 = arith.divf %243, %244 : vector<1x64xf32>
    %246 = vector.extract_strided_slice %239 {offsets = [0, 64], sizes = [1, 64], strides = [1, 1]} : vector<1x256xf32> to vector<1x64xf32>
    %247 = arith.negf %246 : vector<1x64xf32>
    %248 = math.exp %247 : vector<1x64xf32>
    %cst_74 = arith.constant 1.000000e+00 : f32
    %249 = vector.broadcast %cst_74 : f32 to vector<1x64xf32>
    %250 = arith.addf %249, %248 : vector<1x64xf32>
    %251 = arith.divf %249, %250 : vector<1x64xf32>
    %252 = vector.extract_strided_slice %239 {offsets = [0, 128], sizes = [1, 64], strides = [1, 1]} : vector<1x256xf32> to vector<1x64xf32>
    %253 = math.tanh %252 : vector<1x64xf32>
    %254 = vector.extract_strided_slice %239 {offsets = [0, 192], sizes = [1, 64], strides = [1, 1]} : vector<1x256xf32> to vector<1x64xf32>
    %255 = arith.negf %254 : vector<1x64xf32>
    %256 = math.exp %255 : vector<1x64xf32>
    %cst_75 = arith.constant 1.000000e+00 : f32
    %257 = vector.broadcast %cst_75 : f32 to vector<1x64xf32>
    %258 = arith.addf %257, %256 : vector<1x64xf32>
    %259 = arith.divf %257, %258 : vector<1x64xf32>
    %260 = arith.mulf %251, %231 : vector<1x64xf32>
    %261 = arith.mulf %245, %253 : vector<1x64xf32>
    %262 = arith.addf %260, %261 : vector<1x64xf32>
    %263 = math.tanh %262 : vector<1x64xf32>
    %264 = arith.mulf %259, %263 : vector<1x64xf32>
    %265 = arith.index_cast %c6_i32 : i32 to index
    %c0_76 = arith.constant 0 : index
    %266 = vector.load %arg18[%265, %c0_76] : memref<8x64xf32, #tpu.memory_space<vmem>>, vector<1x64xf32>
    tpu.vector_store %arg18[%265, %c0_76], %264 {strides = array<i32>} : memref<8x64xf32, #tpu.memory_space<vmem>>, vector<1x64xf32>,
    %c7_i32 = arith.constant 7 : i32
    %267 = arith.index_cast %c7_i32 : i32 to index
    %c0_77 = arith.constant 0 : index
    %268 = vector.load %arg17[%267, %c0_77] : memref<8x256xf32, #tpu.memory_space<vmem>>, vector<1x256xf32>
    %cst_78 = arith.constant dense<0.000000e+00> : vector<1x256xf32>
    %269 = tpu.matmul %264, %47, %cst_78 {dimension_numbers = #tpu.dot_dimension_numbers<[1], [0], [0], [1], [0, 0, 1, 1], [], []>} : vector<1x64xf32>, vector<64x256xf32>, vector<1x256xf32> -> vector<1x256xf32>
    %270 = arith.addf %268, %269 : vector<1x256xf32>
    %271 = vector.extract_strided_slice %270 {offsets = [0, 0], sizes = [1, 64], strides = [1, 1]} : vector<1x256xf32> to vector<1x64xf32>
    %272 = arith.negf %271 : vector<1x64xf32>
    %273 = math.exp %272 : vector<1x64xf32>
    %cst_79 = arith.constant 1.000000e+00 : f32
    %274 = vector.broadcast %cst_79 : f32 to vector<1x64xf32>
    %275 = arith.addf %274, %273 : vector<1x64xf32>
    %276 = arith.divf %274, %275 : vector<1x64xf32>
    %277 = vector.extract_strided_slice %270 {offsets = [0, 64], sizes = [1, 64], strides = [1, 1]} : vector<1x256xf32> to vector<1x64xf32>
    %278 = arith.negf %277 : vector<1x64xf32>
    %279 = math.exp %278 : vector<1x64xf32>
    %cst_80 = arith.constant 1.000000e+00 : f32
    %280 = vector.broadcast %cst_80 : f32 to vector<1x64xf32>
    %281 = arith.addf %280, %279 : vector<1x64xf32>
    %282 = arith.divf %280, %281 : vector<1x64xf32>
    %283 = vector.extract_strided_slice %270 {offsets = [0, 128], sizes = [1, 64], strides = [1, 1]} : vector<1x256xf32> to vector<1x64xf32>
    %284 = math.tanh %283 : vector<1x64xf32>
    %285 = vector.extract_strided_slice %270 {offsets = [0, 192], sizes = [1, 64], strides = [1, 1]} : vector<1x256xf32> to vector<1x64xf32>
    %286 = arith.negf %285 : vector<1x64xf32>
    %287 = math.exp %286 : vector<1x64xf32>
    %cst_81 = arith.constant 1.000000e+00 : f32
    %288 = vector.broadcast %cst_81 : f32 to vector<1x64xf32>
    %289 = arith.addf %288, %287 : vector<1x64xf32>
    %290 = arith.divf %288, %289 : vector<1x64xf32>
    %291 = arith.mulf %282, %262 : vector<1x64xf32>
    %292 = arith.mulf %276, %284 : vector<1x64xf32>
    %293 = arith.addf %291, %292 : vector<1x64xf32>
    %294 = math.tanh %293 : vector<1x64xf32>
    %295 = arith.mulf %290, %294 : vector<1x64xf32>
    %296 = arith.index_cast %c7_i32 : i32 to index
    %c0_82 = arith.constant 0 : index
    %297 = vector.load %arg18[%296, %c0_82] : memref<8x64xf32, #tpu.memory_space<vmem>>, vector<1x64xf32>
    tpu.vector_store %arg18[%296, %c0_82], %295 {strides = array<i32>} : memref<8x64xf32, #tpu.memory_space<vmem>>, vector<1x64xf32>,
    %c8_i32 = arith.constant 8 : i32
    %c0_83 = arith.constant 0 : index
    %c0_84 = arith.constant 0 : index
    %298 = vector.load %arg18[%c0_83, %c0_84] : memref<8x64xf32, #tpu.memory_space<vmem>>, vector<8x64xf32>
    %c0_85 = arith.constant 0 : index
    %c0_86 = arith.constant 0 : index
    %299 = vector.load %arg12[%c0_85, %c0_86] : memref<8x68xf32, #tpu.memory_space<vmem>>, vector<8x64xf32>
    tpu.vector_store %arg12[%c0_85, %c0_86], %298 {strides = array<i32>} : memref<8x68xf32, #tpu.memory_space<vmem>>, vector<8x64xf32>,
    %c0_87 = arith.constant 0 : index
    %c64 = arith.constant 64 : index
    %300 = vector.load %arg12[%c0_87, %c64] : memref<8x68xf32, #tpu.memory_space<vmem>>, vector<8x4xf32>
    tpu.vector_store %arg12[%c0_87, %c64], %39 {strides = array<i32>} : memref<8x68xf32, #tpu.memory_space<vmem>>, vector<8x4xf32>,
    %c0_88 = arith.constant 0 : index
    %c0_89 = arith.constant 0 : index
    %301 = vector.load %arg15[%c0_88, %c0_89] : memref<1x64xf32, #tpu.memory_space<vmem>>, vector<1x64xf32>
    tpu.vector_store %arg15[%c0_88, %c0_89], %295 {strides = array<i32>} : memref<1x64xf32, #tpu.memory_space<vmem>>, vector<1x64xf32>,
    %c0_90 = arith.constant 0 : index
    %c0_91 = arith.constant 0 : index
    %302 = vector.load %arg16[%c0_90, %c0_91] : memref<1x64xf32, #tpu.memory_space<vmem>>, vector<1x64xf32>
    tpu.vector_store %arg16[%c0_90, %c0_91], %293 {strides = array<i32>} : memref<1x64xf32, #tpu.memory_space<vmem>>, vector<1x64xf32>,
    %c0_92 = arith.constant 0 : index
    %c0_93 = arith.constant 0 : index
    %303 = vector.load %arg13[%c0_92, %c0_93] : memref<1x64xf32, #tpu.memory_space<vmem>>, vector<1x64xf32>
    tpu.vector_store %arg13[%c0_92, %c0_93], %295 {strides = array<i32>} : memref<1x64xf32, #tpu.memory_space<vmem>>, vector<1x64xf32>,
    %c0_94 = arith.constant 0 : index
    %c0_95 = arith.constant 0 : index
    %304 = vector.load %arg14[%c0_94, %c0_95] : memref<1x64xf32, #tpu.memory_space<vmem>>, vector<1x64xf32>
    tpu.vector_store %arg14[%c0_94, %c0_95], %293 {strides = array<i32>} : memref<1x64xf32, #tpu.memory_space<vmem>>, vector<1x64xf32>,
    return
  }
  func.func @transform_0(%arg0: i32) -> (i32, i32) {
    %c0_i32 = arith.constant 0 : i32
    %c0_i32_0 = arith.constant 0 : i32
    return %arg0, %c0_i32 : i32, i32
  }
  func.func @transform_1(%arg0: i32) -> (i32, i32) {
    %c0_i32 = arith.constant 0 : i32
    %c0_i32_0 = arith.constant 0 : i32
    return %arg0, %c0_i32 : i32, i32
  }
  func.func @transform_2(%arg0: i32) -> (i32, i32) {
    %c0_i32 = arith.constant 0 : i32
    %c0_i32_0 = arith.constant 0 : i32
    %c0_i32_1 = arith.constant 0 : i32
    return %c0_i32, %c0_i32_0 : i32, i32
  }
  func.func @transform_3(%arg0: i32) -> (i32, i32) {
    %c0_i32 = arith.constant 0 : i32
    %c0_i32_0 = arith.constant 0 : i32
    %c0_i32_1 = arith.constant 0 : i32
    return %c0_i32, %c0_i32_0 : i32, i32
  }
  func.func @transform_4(%arg0: i32) -> (i32, i32) {
    %c0_i32 = arith.constant 0 : i32
    %c0_i32_0 = arith.constant 0 : i32
    %c0_i32_1 = arith.constant 0 : i32
    return %c0_i32, %c0_i32_0 : i32, i32
  }
  func.func @transform_5(%arg0: i32) -> (i32, i32) {
    %c0_i32 = arith.constant 0 : i32
    %c0_i32_0 = arith.constant 0 : i32
    %c0_i32_1 = arith.constant 0 : i32
    return %c0_i32, %c0_i32_0 : i32, i32
  }
  func.func @transform_6(%arg0: i32) -> (i32, i32) {
    %c0_i32 = arith.constant 0 : i32
    %c0_i32_0 = arith.constant 0 : i32
    %c0_i32_1 = arith.constant 0 : i32
    return %c0_i32, %c0_i32_0 : i32, i32
  }
  func.func @transform_7(%arg0: i32) -> (i32, i32) {
    %c0_i32 = arith.constant 0 : i32
    %c0_i32_0 = arith.constant 0 : i32
    %c0_i32_1 = arith.constant 0 : i32
    return %c0_i32, %c0_i32_0 : i32, i32
  }
  func.func @transform_8(%arg0: i32) -> (i32, i32) {
    %c0_i32 = arith.constant 0 : i32
    %c0_i32_0 = arith.constant 0 : i32
    %c0_i32_1 = arith.constant 0 : i32
    return %c0_i32, %c0_i32_0 : i32, i32
  }
  func.func @transform_9(%arg0: i32) -> (i32, i32) {
    %c0_i32 = arith.constant 0 : i32
    %c0_i32_0 = arith.constant 0 : i32
    %c0_i32_1 = arith.constant 0 : i32
    return %c0_i32, %c0_i32_0 : i32, i32
  }
  func.func @transform_10(%arg0: i32) -> (i32, i32) {
    %c0_i32 = arith.constant 0 : i32
    %c0_i32_0 = arith.constant 0 : i32
    %c0_i32_1 = arith.constant 0 : i32
    return %c0_i32, %c0_i32_0 : i32, i32
  }
  func.func @transform_11(%arg0: i32) -> (i32, i32) {
    %c0_i32 = arith.constant 0 : i32
    %c0_i32_0 = arith.constant 0 : i32
    return %arg0, %c0_i32 : i32, i32
  }
  func.func @transform_12(%arg0: i32) -> (i32, i32) {
    %c0_i32 = arith.constant 0 : i32
    %c0_i32_0 = arith.constant 0 : i32
    %c0_i32_1 = arith.constant 0 : i32
    return %c0_i32, %c0_i32_0 : i32, i32
  }
  func.func @transform_13(%arg0: i32) -> (i32, i32) {
    %c0_i32 = arith.constant 0 : i32
    %c0_i32_0 = arith.constant 0 : i32
    %c0_i32_1 = arith.constant 0 : i32
    return %c0_i32, %c0_i32_0 : i32, i32
  }
}

</mosaic_0001>

<llo_original>
// kernel: tpu_custom_call.1
$region0: #{tpu_custom_call.1}
  #allocation0 [shape = 'u32[]', space=smem, size = 0x4, offset = 0x4, fixed_abs, tag = 'smem constant byte address 0x4 - core index']
  #allocation1 [shape = 'u32[144,128]{1,0:T(1,128)}', space=vmem, size = 0x12000, scoped, tag = 'internal scratch']
  #allocation2 [shape = 'f32[1,64]{1,0:T(1,128)}', space=vmem, size = 0x200, scoped, tag = 'scratch operand']
  #allocation3 [shape = 'f32[1,64]{1,0:T(1,128)}', space=vmem, size = 0x200, scoped, tag = 'scratch operand']
  #allocation4 [shape = 'f32[8,256]{1,0:T(8,128)}', space=vmem, size = 0x2000, scoped, tag = 'scratch operand']
  #allocation5 [shape = 'f32[8,64]{1,0:T(8,128)}', space=vmem, size = 0x1000, scoped, tag = 'scratch operand']
  %s0 = inlined_call_operand.vmem [shape: f32[8,3], index: 0, kind: input, shape index: {}]
  %s1 = inlined_call_operand.vmem [shape: f32[8,16], index: 1, kind: input, shape index: {}]
  %s2 = inlined_call_operand.vmem [shape: f32[1,64], index: 2, kind: input, shape index: {}]
  %s3 = inlined_call_operand.vmem [shape: f32[1,64], index: 3, kind: input, shape index: {}]
  %s4 = inlined_call_operand.vmem [shape: f32[3,256], index: 4, kind: input, shape index: {}]
  %s5 = inlined_call_operand.hbm [shape: f32[64,256], index: 5, kind: input, shape index: {}]
  %s6 = inlined_call_operand.vmem [shape: f32[1,256], index: 6, kind: input, shape index: {}]
  %s7 = inlined_call_operand.vmem [shape: f32[16,32], index: 7, kind: input, shape index: {}]
  %s8 = inlined_call_operand.vmem [shape: f32[1,32], index: 8, kind: input, shape index: {}]
  %s9 = inlined_call_operand.vmem [shape: f32[32,4], index: 9, kind: input, shape index: {}]
  %s10 = inlined_call_operand.vmem [shape: f32[1,4], index: 10, kind: input, shape index: {}]
  %s11 = inlined_call_operand.hbm [shape: f32[8,68], index: 11, kind: output, shape index: {0}]
  %s12 = inlined_call_operand.hbm [shape: f32[1,64], index: 12, kind: output, shape index: {1}]
  %s13 = inlined_call_operand.hbm [shape: f32[1,64], index: 13, kind: output, shape index: {2}]
  %14 = xla_tuple %s11, %s12, %s13
  %s15 = sld [smem:[#allocation0]]
  $region78: #{tpu_custom_call.1} parent=0
    _
  %s17 = ssub.s32 1, %s15
  %s18 = scalar_select 0, %s17, %s15
  $region1: #{tpu_custom_call.1} parent=0
    #allocation6 [shape = 'u8[65536]{0}', space=vmem, size = 0x10000, scoped, tag = 'input window, operand 5, single buffered']
    #allocation7 [shape = 's32[1]{0}', space=sflag, size = 0x4, scoped, tag = 'scoped memory for tpu_custom_call.1']
    #allocation8 [shape = 's32[1]{0}', space=sflag, size = 0x4, scoped, tag = 'scoped memory for tpu_custom_call.1']
    #allocation9 [shape = 'u8[4096]{0}', space=vmem, size = 0x1000, scoped, tag = 'output window, operand 0, single buffered']
    #allocation10 [shape = 'u8[512]{0}', space=vmem, size = 0x400, scoped, tag = 'output window, operand 1, single buffered']
    #allocation11 [shape = 's32[1]{0}', space=sflag, size = 0x4, scoped, tag = 'scoped memory for tpu_custom_call.1']
    #allocation12 [shape = 'u8[512]{0}', space=vmem, size = 0x400, scoped, tag = 'output window, operand 2, single buffered']
    %19 = vsyncpa [#allocation7], 0
    %20 = vsyncpa [#allocation8], 0
    %21 = vsyncpa [#allocation11], 0
    // Predicated region
    $region2: #{tpu_custom_call.1} parent=1 // pred_check
      _
    $region3: #{tpu_custom_call.1} parent=1 // pred_check_branch
      %23 = sbr.rel (0) target = $region5
    $region4: #{tpu_custom_call.1} parent=1 // pred_region
      _
    $region5: #{tpu_custom_call.1} parent=1 // pred_fallthru
      _
    // Predicated region
    $region6: #{tpu_custom_call.1} parent=1 // pred_check
      _
    $region7: #{tpu_custom_call.1} parent=1 // pred_check_branch
      %25 = sbr.rel (0) target = $region9
    $region8: #{tpu_custom_call.1} parent=1 // pred_region
      _
    $region9: #{tpu_custom_call.1} parent=1 // pred_fallthru
      _
    // Predicated region
    $region10: #{tpu_custom_call.1} parent=1 // pred_check
      _
    $region11: #{tpu_custom_call.1} parent=1 // pred_check_branch
      %27 = sbr.rel (0) target = $region13
    $region12: #{tpu_custom_call.1} parent=1 // pred_region
      _
    $region13: #{tpu_custom_call.1} parent=1 // pred_fallthru
      _
    // Predicated region
    $region14: #{tpu_custom_call.1} parent=1 // pred_check
      _
    $region15: #{tpu_custom_call.1} parent=1 // pred_check_branch
      %29 = sbr.rel (0) target = $region17
    $region16: #{tpu_custom_call.1} parent=1 // pred_region
      _
    $region17: #{tpu_custom_call.1} parent=1 // pred_fallthru
      _
    // Predicated region
    $region18: #{tpu_custom_call.1} parent=1 // pred_check
      _
    $region19: #{tpu_custom_call.1} parent=1 // pred_check_branch
      %31 = sbr.rel (0) target = $region21
    $region20: #{tpu_custom_call.1} parent=1 // pred_region
      _
    $region21: #{tpu_custom_call.1} parent=1 // pred_fallthru
      _
    // Predicated region
    $region22: #{tpu_custom_call.1} parent=1 // pred_check
      _
    $region23: #{tpu_custom_call.1} parent=1 // pred_check_branch
      %33 = sbr.rel (0) target = $region25
    $region24: #{tpu_custom_call.1} parent=1 // pred_region
      %s35 = ssub.s32 2048, 2048
      %36 = vsyncadd [#allocation7], %s35
      %s37 = sshll.u32 [#allocation6], 4
      %s38 = int_to_ptr.vmem [resolvable:$true] %s37
      %43 = dma.hbm_to_vmem [thread:$0]  %s5, 2048, %s38, [#allocation7], 256, 256, 16
    $region25: #{tpu_custom_call.1} parent=1 // pred_fallthru
      _
    // Predicated region
    $region26: #{tpu_custom_call.1} parent=1 // pred_check
      _
    $region27: #{tpu_custom_call.1} parent=1 // pred_check_branch
      %45 = sbr.rel (0) target = $region29
    $region28: #{tpu_custom_call.1} parent=1 // pred_region
      _
    $region29: #{tpu_custom_call.1} parent=1 // pred_fallthru
      _
    // Predicated region
    $region30: #{tpu_custom_call.1} parent=1 // pred_check
      _
    $region31: #{tpu_custom_call.1} parent=1 // pred_check_branch
      %47 = sbr.rel (0) target = $region33
    $region32: #{tpu_custom_call.1} parent=1 // pred_region
      _
    $region33: #{tpu_custom_call.1} parent=1 // pred_fallthru
      _
    // Predicated region
    $region34: #{tpu_custom_call.1} parent=1 // pred_check
      _
    $region35: #{tpu_custom_call.1} parent=1 // pred_check_branch
      %49 = sbr.rel (0) target = $region37
    $region36: #{tpu_custom_call.1} parent=1 // pred_region
      _
    $region37: #{tpu_custom_call.1} parent=1 // pred_fallthru
      _
    // Predicated region
    $region38: #{tpu_custom_call.1} parent=1 // pred_check
      _
    $region39: #{tpu_custom_call.1} parent=1 // pred_check_branch
      %51 = sbr.rel (0) target = $region41
    $region40: #{tpu_custom_call.1} parent=1 // pred_region
      _
    $region41: #{tpu_custom_call.1} parent=1 // pred_fallthru
      _
    // Predicated region
    $region42: #{tpu_custom_call.1} parent=1 // pred_check
      _
    $region43: #{tpu_custom_call.1} parent=1 // pred_check_branch
      %53 = sbr.rel (0) target = $region45
    $region44: #{tpu_custom_call.1} parent=1 // pred_region
      _
    $region45: #{tpu_custom_call.1} parent=1 // pred_fallthru
      _
    // Predicated region
    $region46: #{tpu_custom_call.1} parent=1 // pred_check
      _
    $region47: #{tpu_custom_call.1} parent=1 // pred_check_branch
      %55 = sbr.rel (0) target = $region49
    $region48: #{tpu_custom_call.1} parent=1 // pred_region
      %56 = dma.done [#allocation7], 2048
    $region49: #{tpu_custom_call.1} parent=1 // pred_fallthru
      _
    %p57 = scmp.eq.s32.totalorder 0, 0
    // Predicated region
    $region50: #{tpu_custom_call.1} parent=1 // pred_check
      %p58 = pneg %p57
    $region51: #{tpu_custom_call.1} parent=1 // pred_check_branch
      %60 = sbr.rel (%p58) target = $region53
    $region52: #{tpu_custom_call.1} parent=1 // pred_region
      %v61 = vld [vmem:[%s2] sm:$0x1]
      %vm62 = vcmask 516096
      %63 = vst.msk [vmem:[#allocation2] sm:$0x1] %vm62, %v61
      %v64 = vld [vmem:[%s3] sm:$0x1]
      %65 = vst.msk [vmem:[#allocation3] sm:$0x1] %vm62, %v64
    $region53: #{tpu_custom_call.1} parent=1 // pred_fallthru
      _
    %v66 = vld [vmem:[%s1] sm:$0xff]
    %v67 = vld [vmem:[%s7] sm:$0xff]
    %v68 = vld [vmem:[%s7 + $0x8] sm:$0xff]
    %v69 = vld [vmem:[%s8] sm:$0x1]
    %v71 = vlaneseq
    %v72 = vshrl.u32 %v71, 7
    %v73 = vsub.s32 0, %v72
    %v74 = vrot.slane %v69, %v73
    %vm76 = vcmask 130048
    %v78 = vsel %vm76, %v66, 0
    %80 = vmatprep.subr.mxu0 0.0
    %81 = vmatpush1.msra.mxu0 0.0
    %82 = vmatprep.subr.mxu0 0.0
    %83 = vmatpush1.msra.mxu0 0.0
    %84 = vmatprep.subr.mxu0 0.0
    %85 = vmatpush1.msra.mxu0 0.0
    %86 = vmatprep.subr.mxu0 0.0
    %87 = vmatpush1.msra.mxu0 0.0
    %88 = vmatprep.subr.mxu0 0.0
    %89 = vmatpush1.msra.mxu0 0.0
    %90 = vmatprep.subr.mxu0 0.0
    %91 = vmatpush1.msra.mxu0 0.0
    %92 = vmatprep.subr.mxu0 0.0
    %93 = vmatpush1.msra.mxu0 0.0
    %94 = vmatprep.subr.mxu0 0.0
    %95 = vmatpush1.msra.mxu0 0.0
    %96 = vmatprep.subr.mxu0 0.0
    %97 = vmatpush1.msra.mxu0 0.0
    %98 = vmatprep.subr.mxu0 0.0
    %99 = vmatpush1.msra.mxu0 0.0
    %100 = vmatprep.subr.mxu0 0.0
    %101 = vmatpush1.msra.mxu0 0.0
    %102 = vmatprep.subr.mxu0 0.0
    %103 = vmatpush1.msra.mxu0 0.0
    %104 = vmatprep.subr.mxu0 0.0
    %105 = vmatpush1.msra.mxu0 0.0
    %106 = vmatprep.subr.mxu0 0.0
    %107 = vmatpush1.msra.mxu0 0.0
    %108 = vmatprep.subr.mxu0 0.0
    %109 = vmatpush1.msra.mxu0 %v68
    %110 = vmatprep.subr.mxu0 0.0
    %111 = vmatpush1.msra.mxu0 %v67
    %112 = vmatprep.subr.mxu0 0.0
    %113 = vmatpush2.msra.mxu0 0.0
    %114 = vmatprep.subr.mxu0 0.0
    %115 = vmatpush2.msra.mxu0 0.0
    %116 = vmatprep.subr.mxu0 0.0
    %117 = vmatpush2.msra.mxu0 0.0
    %118 = vmatprep.subr.mxu0 0.0
    %119 = vmatpush2.msra.mxu0 0.0
    %120 = vmatprep.subr.mxu0 0.0
    %121 = vmatpush2.msra.mxu0 0.0
    %122 = vmatprep.subr.mxu0 0.0
    %123 = vmatpush2.msra.mxu0 0.0
    %124 = vmatprep.subr.mxu0 0.0
    %125 = vmatpush2.msra.mxu0 0.0
    %126 = vmatprep.subr.mxu0 0.0
    %127 = vmatpush2.msra.mxu0 0.0
    %128 = vmatprep.subr.mxu0 0.0
    %129 = vmatpush2.msra.mxu0 0.0
    %130 = vmatprep.subr.mxu0 0.0
    %131 = vmatpush2.msra.mxu0 0.0
    %132 = vmatprep.subr.mxu0 0.0
    %133 = vmatpush2.msra.mxu0 0.0
    %134 = vmatprep.subr.mxu0 0.0
    %135 = vmatpush2.msra.mxu0 0.0
    %136 = vmatprep.subr.mxu0 0.0
    %137 = vmatpush2.msra.mxu0 0.0
    %138 = vmatprep.subr.mxu0 0.0
    %139 = vmatpush2.msra.mxu0 0.0
    %140 = vmatprep.subr.mxu0 0.0
    %141 = vmatpush2.msra.mxu0 0.0
    %142 = vmatprep.subr.mxu0 0.0
    %143 = vmatpush2.msra.mxu0 0.0
    %144 = vmatprep.mubr.f32.mxu0 0.0
    %145 = vmatmul.mubr.f32.gmra.mxu0 %v78
    %v146 = vpop.f32.mrf.mxu0
    %v147 = vadd.f32 %v74, %v146
    %v148 = vpop.f32.mrf.mxu0
    %149 = vdwg.mxu0
    %v150 = vmul.f32 %v147, 0.5
    %v151 = vmul.f32 %v147, 0.044715
    %v152 = vmul.f32 %v151, %v147
    %v153 = vmul.f32 %v152, %v147
    %v154 = vadd.f32 %v147, %v153
    %v155 = vmul.f32 %v154, 0.7978846
    %v156 = vtanh.pop %v155
    %v157 = vadd.f32 %v156, 1.0
    %v158 = vmul.f32 %v150, %v157
    %v159 = vld [vmem:[%s9] sm:$0xff]
    %v160 = vld [vmem:[%s9 + $0x8] sm:$0xff]
    %v161 = vld [vmem:[%s9 + $0x10] sm:$0xff]
    %v162 = vld [vmem:[%s9 + $0x18] sm:$0xff]
    %v163 = vld [vmem:[%s10] sm:$0x1]
    %v165 = vlaneseq
    %v166 = vshrl.u32 %v165, 7
    %v167 = vsub.s32 0, %v166
    %v168 = vrot.slane %v163, %v167
    %vm170 = vcmask 261120
    %v172 = vsel %vm170, %v158, 0
    %174 = vmatprep.subr.mxu0 0.0
    %175 = vmatpush1.msra.mxu0 0.0
    %176 = vmatprep.subr.mxu0 0.0
    %177 = vmatpush1.msra.mxu0 0.0
    %178 = vmatprep.subr.mxu0 0.0
    %179 = vmatpush1.msra.mxu0 0.0
    %180 = vmatprep.subr.mxu0 0.0
    %181 = vmatpush1.msra.mxu0 0.0
    %182 = vmatprep.subr.mxu0 0.0
    %183 = vmatpush1.msra.mxu0 0.0
    %184 = vmatprep.subr.mxu0 0.0
    %185 = vmatpush1.msra.mxu0 0.0
    %186 = vmatprep.subr.mxu0 0.0
    %187 = vmatpush1.msra.mxu0 0.0
    %188 = vmatprep.subr.mxu0 0.0
    %189 = vmatpush1.msra.mxu0 0.0
    %190 = vmatprep.subr.mxu0 0.0
    %191 = vmatpush1.msra.mxu0 0.0
    %192 = vmatprep.subr.mxu0 0.0
    %193 = vmatpush1.msra.mxu0 0.0
    %194 = vmatprep.subr.mxu0 0.0
    %195 = vmatpush1.msra.mxu0 0.0
    %196 = vmatprep.subr.mxu0 0.0
    %197 = vmatpush1.msra.mxu0 0.0
    %198 = vmatprep.subr.mxu0 0.0
    %199 = vmatpush1.msra.mxu0 %v162
    %200 = vmatprep.subr.mxu0 0.0
    %201 = vmatpush1.msra.mxu0 %v161
    %202 = vmatprep.subr.mxu0 0.0
    %203 = vmatpush1.msra.mxu0 %v160
    %204 = vmatprep.subr.mxu0 0.0
    %205 = vmatpush1.msra.mxu0 %v159
    %206 = vmatprep.subr.mxu0 0.0
    %207 = vmatpush2.msra.mxu0 0.0
    %208 = vmatprep.subr.mxu0 0.0
    %209 = vmatpush2.msra.mxu0 0.0
    %210 = vmatprep.subr.mxu0 0.0
    %211 = vmatpush2.msra.mxu0 0.0
    %212 = vmatprep.subr.mxu0 0.0
    %213 = vmatpush2.msra.mxu0 0.0
    %214 = vmatprep.subr.mxu0 0.0
    %215 = vmatpush2.msra.mxu0 0.0
    %216 = vmatprep.subr.mxu0 0.0
    %217 = vmatpush2.msra.mxu0 0.0
    %218 = vmatprep.subr.mxu0 0.0
    %219 = vmatpush2.msra.mxu0 0.0
    %220 = vmatprep.subr.mxu0 0.0
    %221 = vmatpush2.msra.mxu0 0.0
    %222 = vmatprep.subr.mxu0 0.0
    %223 = vmatpush2.msra.mxu0 0.0
    %224 = vmatprep.subr.mxu0 0.0
    %225 = vmatpush2.msra.mxu0 0.0
    %226 = vmatprep.subr.mxu0 0.0
    %227 = vmatpush2.msra.mxu0 0.0
    %228 = vmatprep.subr.mxu0 0.0
    %229 = vmatpush2.msra.mxu0 0.0
    %230 = vmatprep.subr.mxu0 0.0
    %231 = vmatpush2.msra.mxu0 0.0
    %232 = vmatprep.subr.mxu0 0.0
    %233 = vmatpush2.msra.mxu0 0.0
    %234 = vmatprep.subr.mxu0 0.0
    %235 = vmatpush2.msra.mxu0 0.0
    %236 = vmatprep.subr.mxu0 0.0
    %237 = vmatpush2.msra.mxu0 0.0
    %238 = vmatprep.mubr.f32.mxu0 0.0
    %239 = vmatmul.mubr.f32.gmra.mxu0 %v172
    %v240 = vpop.f32.mrf.mxu0
    %v241 = vadd.f32 %v168, %v240
    %v242 = vpop.f32.mrf.mxu0
    %243 = vdwg.mxu0
    %v244 = vmul.f32 %v241, 0.5
    %v245 = vmul.f32 %v241, 0.044715
    %v246 = vmul.f32 %v245, %v241
    %v247 = vmul.f32 %v246, %v241
    %v248 = vadd.f32 %v241, %v247
    %v249 = vmul.f32 %v248, 0.7978846
    %v250 = vtanh.pop %v249
    %v251 = vadd.f32 %v250, 1.0
    %v252 = vmul.f32 %v244, %v251
    %v253 = vld [vmem:[%s0] sm:$0xff]
    %v254 = vld [vmem:[%s4] sm:$0x77]
    %v255 = vld [vmem:[%s6] sm:$0x3]
    %v257 = vlaneseq
    %v258 = vshrl.u32 %v257, 7
    %v259 = vsub.s32 0, %v258
    %v260 = vrot.slane %v255, %v259
    %v261 = vlaneseq
    %v262 = vshrl.u32 %v261, 7
    %v263 = vsub.s32 1, %v262
    %v264 = vrot.slane %v255, %v263
    %v268 = vcombine.high %v254, %v254
    %vm269 = vcmask 23552
    %v271 = vsel %vm269, %v253, 0
    %vm273 = vcmask 1042432
    %v274 = vsel %vm273, %v254, 0
    %v276 = vsel %vm273, %v268, 0
    %278 = vmatprep.subr.mxu0 0.0
    %279 = vmatpush1.msra.mxu0 0.0
    %280 = vmatprep.subr.mxu0 0.0
    %281 = vmatpush1.msra.mxu0 0.0
    %282 = vmatprep.subr.mxu0 0.0
    %283 = vmatpush1.msra.mxu0 0.0
    %284 = vmatprep.subr.mxu0 0.0
    %285 = vmatpush1.msra.mxu0 0.0
    %286 = vmatprep.subr.mxu0 0.0
    %287 = vmatpush1.msra.mxu0 0.0
    %288 = vmatprep.subr.mxu0 0.0
    %289 = vmatpush1.msra.mxu0 0.0
    %290 = vmatprep.subr.mxu0 0.0
    %291 = vmatpush1.msra.mxu0 0.0
    %292 = vmatprep.subr.mxu0 0.0
    %293 = vmatpush1.msra.mxu0 0.0
    %294 = vmatprep.subr.mxu0 0.0
    %295 = vmatpush1.msra.mxu0 0.0
    %296 = vmatprep.subr.mxu0 0.0
    %297 = vmatpush1.msra.mxu0 0.0
    %298 = vmatprep.subr.mxu0 0.0
    %299 = vmatpush1.msra.mxu0 0.0
    %300 = vmatprep.subr.mxu0 0.0
    %301 = vmatpush1.msra.mxu0 0.0
    %302 = vmatprep.subr.mxu0 0.0
    %303 = vmatpush1.msra.mxu0 0.0
    %304 = vmatprep.subr.mxu0 0.0
    %305 = vmatpush1.msra.mxu0 0.0
    %306 = vmatprep.subr.mxu0 0.0
    %307 = vmatpush1.msra.mxu0 0.0
    %308 = vmatprep.subr.mxu0 %v276
    %309 = vmatpush1.msra.mxu0 %v274
    %310 = vmatprep.subr.mxu0 0.0
    %311 = vmatpush2.msra.mxu0 0.0
    %312 = vmatprep.subr.mxu0 0.0
    %313 = vmatpush2.msra.mxu0 0.0
    %314 = vmatprep.subr.mxu0 0.0
    %315 = vmatpush2.msra.mxu0 0.0
    %316 = vmatprep.subr.mxu0 0.0
    %317 = vmatpush2.msra.mxu0 0.0
    %318 = vmatprep.subr.mxu0 0.0
    %319 = vmatpush2.msra.mxu0 0.0
    %320 = vmatprep.subr.mxu0 0.0
    %321 = vmatpush2.msra.mxu0 0.0
    %322 = vmatprep.subr.mxu0 0.0
    %323 = vmatpush2.msra.mxu0 0.0
    %324 = vmatprep.subr.mxu0 0.0
    %325 = vmatpush2.msra.mxu0 0.0
    %326 = vmatprep.subr.mxu0 0.0
    %327 = vmatpush2.msra.mxu0 0.0
    %328 = vmatprep.subr.mxu0 0.0
    %329 = vmatpush2.msra.mxu0 0.0
    %330 = vmatprep.subr.mxu0 0.0
    %331 = vmatpush2.msra.mxu0 0.0
    %332 = vmatprep.subr.mxu0 0.0
    %333 = vmatpush2.msra.mxu0 0.0
    %334 = vmatprep.subr.mxu0 0.0
    %335 = vmatpush2.msra.mxu0 0.0
    %336 = vmatprep.subr.mxu0 0.0
    %337 = vmatpush2.msra.mxu0 0.0
    %338 = vmatprep.subr.mxu0 0.0
    %339 = vmatpush2.msra.mxu0 0.0
    %340 = vmatprep.subr.mxu0 0.0
    %341 = vmatpush2.msra.mxu0 0.0
    %342 = vmatprep.mubr.f32.mxu0 0.0
    %343 = vmatmul.mubr.f32.gmra.mxu0 %v271
    %v344 = vpop.f32.mrf.mxu0
    %v345 = vadd.f32 %v260, %v344
    %v346 = vpop.f32.mrf.mxu0
    %v347 = vadd.f32 %v264, %v346
    %348 = vdwg.mxu0
    %349 = vst [vmem:[#allocation4] sm:$0xff] %v345
    %350 = vst [vmem:[#allocation4 + $0x8] sm:$0xff] %v347
    %v351 = vld [vmem:[#allocation6] sm:$0xff]
    %v352 = vld [vmem:[#allocation6 + $0x8] sm:$0xff]
    %v353 = vld [vmem:[#allocation6 + $0x10] sm:$0xff]
    %v354 = vld [vmem:[#allocation6 + $0x18] sm:$0xff]
    %v355 = vld [vmem:[#allocation6 + $0x20] sm:$0xff]
    %v356 = vld [vmem:[#allocation6 + $0x28] sm:$0xff]
    %v357 = vld [vmem:[#allocation6 + $0x30] sm:$0xff]
    %v358 = vld [vmem:[#allocation6 + $0x38] sm:$0xff]
    %v359 = vld [vmem:[#allocation6 + $0x40] sm:$0xff]
    %v360 = vld [vmem:[#allocation6 + $0x48] sm:$0xff]
    %v361 = vld [vmem:[#allocation6 + $0x50] sm:$0xff]
    %v362 = vld [vmem:[#allocation6 + $0x58] sm:$0xff]
    %v363 = vld [vmem:[#allocation6 + $0x60] sm:$0xff]
    %v364 = vld [vmem:[#allocation6 + $0x68] sm:$0xff]
    %v365 = vld [vmem:[#allocation6 + $0x70] sm:$0xff]
    %v366 = vld [vmem:[#allocation6 + $0x78] sm:$0xff]
    %v367 = vld [vmem:[#allocation2] sm:$0x1]
    %v368 = vld [vmem:[#allocation3] sm:$0x1]
    %v369 = vld [vmem:[#allocation4] ss:$8 sm:$0x3]
    %vm370 = vcmask 523264
    %v372 = vsel %vm370, %v367, 0
    %374 = vmatprep.subr.mxu0 0.0
    %375 = vmatpush1.msra.mxu0 0.0
    %376 = vmatprep.subr.mxu0 0.0
    %377 = vmatpush1.msra.mxu0 0.0
    %378 = vmatprep.subr.mxu0 0.0
    %379 = vmatpush1.msra.mxu0 0.0
    %380 = vmatprep.subr.mxu0 0.0
    %381 = vmatpush1.msra.mxu0 0.0
    %382 = vmatprep.subr.mxu0 0.0
    %383 = vmatpush1.msra.mxu0 0.0
    %384 = vmatprep.subr.mxu0 0.0
    %385 = vmatpush1.msra.mxu0 0.0
    %386 = vmatprep.subr.mxu0 0.0
    %387 = vmatpush1.msra.mxu0 0.0
    %388 = vmatprep.subr.mxu0 0.0
    %389 = vmatpush1.msra.mxu0 0.0
    %390 = vmatprep.subr.mxu0 %v366
    %391 = vmatpush1.msra.mxu0 %v365
    %392 = vmatprep.subr.mxu0 %v364
    %393 = vmatpush1.msra.mxu0 %v363
    %394 = vmatprep.subr.mxu0 %v362
    %395 = vmatpush1.msra.mxu0 %v361
    %396 = vmatprep.subr.mxu0 %v360
    %397 = vmatpush1.msra.mxu0 %v359
    %398 = vmatprep.subr.mxu0 %v358
    %399 = vmatpush1.msra.mxu0 %v357
    %400 = vmatprep.subr.mxu0 %v356
    %401 = vmatpush1.msra.mxu0 %v355
    %402 = vmatprep.subr.mxu0 %v354
    %403 = vmatpush1.msra.mxu0 %v353
    %404 = vmatprep.subr.mxu0 %v352
    %405 = vmatpush1.msra.mxu0 %v351
    %406 = vmatprep.subr.mxu0 0.0
    %407 = vmatpush2.msra.mxu0 0.0
    %408 = vmatprep.subr.mxu0 0.0
    %409 = vmatpush2.msra.mxu0 0.0
    %410 = vmatprep.subr.mxu0 0.0
    %411 = vmatpush2.msra.mxu0 0.0
    %412 = vmatprep.subr.mxu0 0.0
    %413 = vmatpush2.msra.mxu0 0.0
    %414 = vmatprep.subr.mxu0 0.0
    %415 = vmatpush2.msra.mxu0 0.0
    %416 = vmatprep.subr.mxu0 0.0
    %417 = vmatpush2.msra.mxu0 0.0
    %418 = vmatprep.subr.mxu0 0.0
    %419 = vmatpush2.msra.mxu0 0.0
    %420 = vmatprep.subr.mxu0 0.0
    %421 = vmatpush2.msra.mxu0 0.0
    %422 = vmatprep.subr.mxu0 0.0
    %423 = vmatpush2.msra.mxu0 0.0
    %424 = vmatprep.subr.mxu0 0.0
    %425 = vmatpush2.msra.mxu0 0.0
    %426 = vmatprep.subr.mxu0 0.0
    %427 = vmatpush2.msra.mxu0 0.0
    %428 = vmatprep.subr.mxu0 0.0
    %429 = vmatpush2.msra.mxu0 0.0
    %430 = vmatprep.subr.mxu0 0.0
    %431 = vmatpush2.msra.mxu0 0.0
    %432 = vmatprep.subr.mxu0 0.0
    %433 = vmatpush2.msra.mxu0 0.0
    %434 = vmatprep.subr.mxu0 0.0
    %435 = vmatpush2.msra.mxu0 0.0
    %436 = vmatprep.subr.mxu0 0.0
    %437 = vmatpush2.msra.mxu0 0.0
    %438 = vmatprep.mubr.f32.mxu0 0.0
    %439 = vmatmul.mubr.f32.gmra.mxu0 %v372
    %v440 = vpop.f32.mrf.mxu0
    %v441 = vadd.f32 0.0, %v440
    %v442 = vpop.f32.mrf.mxu0
    %v443 = vadd.f32 0.0, %v442
    %444 = vdwg.mxu0
    %v447 = vcombine.low %v441, %v443
    %v449 = vunpack.c.l.s4 1966171168
    %v450 = vunpack.c.0.s8 %v449
    %v451 = vlaneseq
    %v452 = vshrl.u32 %v451, 7
    %v453 = vsub.s32 %v450, %v452
    %v454 = vrot.slane %v447, %v453
    %v456 = vunpack.c.l.s4 1966171168
    %v457 = vunpack.c.0.s8 %v456
    %v458 = vlaneseq
    %v459 = vshrl.u32 %v458, 7
    %v460 = vsub.s32 %v457, %v459
    %v461 = vrot.slane %v454, %v460
    %v463 = vadd.f32 %v369, %v461
    %v464 = vxor.u32 %v463, 2147483648
    %v465 = vmul.f32 %v464, 1.442695
    %v466 = vpow.pop %v465
    %v467 = vadd.f32 %v466, 1.0
    %v468 = vrcp.pop %v467
    %v469 = vmul.f32 1.0, %v468
    %v471 = vrot.slane %v463, 1
    %v473 = vtanh.pop %v471
    %474 = vrot.lane.b32.xlu0 %v463, 64
    %v475 = vpop.permute.xlu0 %474
    %v476 = vrot.slane %v475, 1
    %v478 = vxor.u32 %v476, 2147483648
    %v479 = vmul.f32 %v478, 1.442695
    %v480 = vpow.pop %v479
    %v481 = vadd.f32 %v480, 1.0
    %v482 = vrcp.pop %v481
    %v483 = vmul.f32 1.0, %v482
    %485 = vrot.lane.b32.xlu0 %v368, 64
    %v486 = vpop.permute.xlu0 %485
    %v488 = vmul.f32 %v469, %v486
    %v489 = vmul.f32 %v469, %v473
    %491 = vrot.lane.b32.xlu0 %v489, 64
    %v492 = vpop.permute.xlu0 %491
    %v494 = vadd.f32 %v488, %v492
    %v495 = vtanh.pop %v494
    %497 = vrot.lane.b32.xlu0 %v495, 64
    %v498 = vpop.permute.xlu0 %497
    %v500 = vmul.f32 %v483, %v498
    %vm501 = vcmask 516096
    %502 = vst.msk [vmem:[#allocation5] sm:$0x1] %vm501, %v500
    %s503 = scalar_lea.vmem [#allocation4], 1
    %v504 = vld [vmem:[%s503] ss:$8 sm:$0x3]
    %v506 = vsel %vm370, %v500, 0
    %508 = vmatprep.subr.mxu0 0.0
    %509 = vmatpush1.msra.mxu0 0.0
    %510 = vmatprep.subr.mxu0 0.0
    %511 = vmatpush1.msra.mxu0 0.0
    %512 = vmatprep.subr.mxu0 0.0
    %513 = vmatpush1.msra.mxu0 0.0
    %514 = vmatprep.subr.mxu0 0.0
    %515 = vmatpush1.msra.mxu0 0.0
    %516 = vmatprep.subr.mxu0 0.0
    %517 = vmatpush1.msra.mxu0 0.0
    %518 = vmatprep.subr.mxu0 0.0
    %519 = vmatpush1.msra.mxu0 0.0
    %520 = vmatprep.subr.mxu0 0.0
    %521 = vmatpush1.msra.mxu0 0.0
    %522 = vmatprep.subr.mxu0 0.0
    %523 = vmatpush1.msra.mxu0 0.0
    %524 = vmatprep.subr.mxu0 %v366
    %525 = vmatpush1.msra.mxu0 %v365
    %526 = vmatprep.subr.mxu0 %v364
    %527 = vmatpush1.msra.mxu0 %v363
    %528 = vmatprep.subr.mxu0 %v362
    %529 = vmatpush1.msra.mxu0 %v361
    %530 = vmatprep.subr.mxu0 %v360
    %531 = vmatpush1.msra.mxu0 %v359
    %532 = vmatprep.subr.mxu0 %v358
    %533 = vmatpush1.msra.mxu0 %v357
    %534 = vmatprep.subr.mxu0 %v356
    %535 = vmatpush1.msra.mxu0 %v355
    %536 = vmatprep.subr.mxu0 %v354
    %537 = vmatpush1.msra.mxu0 %v353
    %538 = vmatprep.subr.mxu0 %v352
    %539 = vmatpush1.msra.mxu0 %v351
    %540 = vmatprep.subr.mxu0 0.0
    %541 = vmatpush2.msra.mxu0 0.0
    %542 = vmatprep.subr.mxu0 0.0
    %543 = vmatpush2.msra.mxu0 0.0
    %544 = vmatprep.subr.mxu0 0.0
    %545 = vmatpush2.msra.mxu0 0.0
    %546 = vmatprep.subr.mxu0 0.0
    %547 = vmatpush2.msra.mxu0 0.0
    %548 = vmatprep.subr.mxu0 0.0
    %549 = vmatpush2.msra.mxu0 0.0
    %550 = vmatprep.subr.mxu0 0.0
    %551 = vmatpush2.msra.mxu0 0.0
    %552 = vmatprep.subr.mxu0 0.0
    %553 = vmatpush2.msra.mxu0 0.0
    %554 = vmatprep.subr.mxu0 0.0
    %555 = vmatpush2.msra.mxu0 0.0
    %556 = vmatprep.subr.mxu0 0.0
    %557 = vmatpush2.msra.mxu0 0.0
    %558 = vmatprep.subr.mxu0 0.0
    %559 = vmatpush2.msra.mxu0 0.0
    %560 = vmatprep.subr.mxu0 0.0
    %561 = vmatpush2.msra.mxu0 0.0
    %562 = vmatprep.subr.mxu0 0.0
    %563 = vmatpush2.msra.mxu0 0.0
    %564 = vmatprep.subr.mxu0 0.0
    %565 = vmatpush2.msra.mxu0 0.0
    %566 = vmatprep.subr.mxu0 0.0
    %567 = vmatpush2.msra.mxu0 0.0
    %568 = vmatprep.subr.mxu0 0.0
    %569 = vmatpush2.msra.mxu0 0.0
    %570 = vmatprep.subr.mxu0 0.0
    %571 = vmatpush2.msra.mxu0 0.0
    %572 = vmatprep.mubr.f32.mxu0 0.0
    %573 = vmatmul.mubr.f32.gmra.mxu0 %v506
    %v574 = vpop.f32.mrf.mxu0
    %v575 = vadd.f32 0.0, %v574
    %v576 = vpop.f32.mrf.mxu0
    %v577 = vadd.f32 0.0, %v576
    %578 = vdwg.mxu0
    %v581 = vcombine.low %v575, %v577
    %v583 = vunpack.c.l.s4 1966171168
    %v584 = vunpack.c.0.s8 %v583
    %v585 = vlaneseq
    %v586 = vshrl.u32 %v585, 7
    %v587 = vsub.s32 %v584, %v586
    %v588 = vrot.slane %v581, %v587
    %v590 = vunpack.c.l.s4 1966171168
    %v591 = vunpack.c.0.s8 %v590
    %v592 = vlaneseq
    %v593 = vshrl.u32 %v592, 7
    %v594 = vsub.s32 %v591, %v593
    %v595 = vrot.slane %v588, %v594
    %v597 = vadd.f32 %v504, %v595
    %v598 = vxor.u32 %v597, 2147483648
    %v599 = vmul.f32 %v598, 1.442695
    %v600 = vpow.pop %v599
    %v601 = vadd.f32 %v600, 1.0
    %v602 = vrcp.pop %v601
    %v603 = vmul.f32 1.0, %v602
    %v605 = vrot.slane %v597, 1
    %v607 = vtanh.pop %v605
    %608 = vrot.lane.b32.xlu0 %v597, 64
    %v609 = vpop.permute.xlu0 %608
    %v610 = vrot.slane %v609, 1
    %v612 = vxor.u32 %v610, 2147483648
    %v613 = vmul.f32 %v612, 1.442695
    %v614 = vpow.pop %v613
    %v615 = vadd.f32 %v614, 1.0
    %v616 = vrcp.pop %v615
    %v617 = vmul.f32 1.0, %v616
    %v618 = vmul.f32 %v603, %v494
    %v619 = vmul.f32 %v603, %v607
    %621 = vrot.lane.b32.xlu0 %v619, 64
    %v622 = vpop.permute.xlu0 %621
    %v624 = vadd.f32 %v618, %v622
    %v625 = vtanh.pop %v624
    %627 = vrot.lane.b32.xlu0 %v625, 64
    %v628 = vpop.permute.xlu0 %627
    %v630 = vmul.f32 %v617, %v628
    %631 = vst.msk [vmem:[#allocation5 + $0x1] sm:$0x1] %vm501, %v630
    %s632 = scalar_lea.vmem [#allocation4], 2
    %v633 = vld [vmem:[%s632] ss:$8 sm:$0x3]
    %v635 = vsel %vm370, %v630, 0
    %637 = vmatprep.subr.mxu0 0.0
    %638 = vmatpush1.msra.mxu0 0.0
    %639 = vmatprep.subr.mxu0 0.0
    %640 = vmatpush1.msra.mxu0 0.0
    %641 = vmatprep.subr.mxu0 0.0
    %642 = vmatpush1.msra.mxu0 0.0
    %643 = vmatprep.subr.mxu0 0.0
    %644 = vmatpush1.msra.mxu0 0.0
    %645 = vmatprep.subr.mxu0 0.0
    %646 = vmatpush1.msra.mxu0 0.0
    %647 = vmatprep.subr.mxu0 0.0
    %648 = vmatpush1.msra.mxu0 0.0
    %649 = vmatprep.subr.mxu0 0.0
    %650 = vmatpush1.msra.mxu0 0.0
    %651 = vmatprep.subr.mxu0 0.0
    %652 = vmatpush1.msra.mxu0 0.0
    %653 = vmatprep.subr.mxu0 %v366
    %654 = vmatpush1.msra.mxu0 %v365
    %655 = vmatprep.subr.mxu0 %v364
    %656 = vmatpush1.msra.mxu0 %v363
    %657 = vmatprep.subr.mxu0 %v362
    %658 = vmatpush1.msra.mxu0 %v361
    %659 = vmatprep.subr.mxu0 %v360
    %660 = vmatpush1.msra.mxu0 %v359
    %661 = vmatprep.subr.mxu0 %v358
    %662 = vmatpush1.msra.mxu0 %v357
    %663 = vmatprep.subr.mxu0 %v356
    %664 = vmatpush1.msra.mxu0 %v355
    %665 = vmatprep.subr.mxu0 %v354
    %666 = vmatpush1.msra.mxu0 %v353
    %667 = vmatprep.subr.mxu0 %v352
    %668 = vmatpush1.msra.mxu0 %v351
    %669 = vmatprep.subr.mxu0 0.0
    %670 = vmatpush2.msra.mxu0 0.0
    %671 = vmatprep.subr.mxu0 0.0
    %672 = vmatpush2.msra.mxu0 0.0
    %673 = vmatprep.subr.mxu0 0.0
    %674 = vmatpush2.msra.mxu0 0.0
    %675 = vmatprep.subr.mxu0 0.0
    %676 = vmatpush2.msra.mxu0 0.0
    %677 = vmatprep.subr.mxu0 0.0
    %678 = vmatpush2.msra.mxu0 0.0
    %679 = vmatprep.subr.mxu0 0.0
    %680 = vmatpush2.msra.mxu0 0.0
    %681 = vmatprep.subr.mxu0 0.0
    %682 = vmatpush2.msra.mxu0 0.0
    %683 = vmatprep.subr.mxu0 0.0
    %684 = vmatpush2.msra.mxu0 0.0
    %685 = vmatprep.subr.mxu0 0.0
    %686 = vmatpush2.msra.mxu0 0.0
    %687 = vmatprep.subr.mxu0 0.0
    %688 = vmatpush2.msra.mxu0 0.0
    %689 = vmatprep.subr.mxu0 0.0
    %690 = vmatpush2.msra.mxu0 0.0
    %691 = vmatprep.subr.mxu0 0.0
    %692 = vmatpush2.msra.mxu0 0.0
    %693 = vmatprep.subr.mxu0 0.0
    %694 = vmatpush2.msra.mxu0 0.0
    %695 = vmatprep.subr.mxu0 0.0
    %696 = vmatpush2.msra.mxu0 0.0
    %697 = vmatprep.subr.mxu0 0.0
    %698 = vmatpush2.msra.mxu0 0.0
    %699 = vmatprep.subr.mxu0 0.0
    %700 = vmatpush2.msra.mxu0 0.0
    %701 = vmatprep.mubr.f32.mxu0 0.0
    %702 = vmatmul.mubr.f32.gmra.mxu0 %v635
    %v703 = vpop.f32.mrf.mxu0
    %v704 = vadd.f32 0.0, %v703
    %v705 = vpop.f32.mrf.mxu0
    %v706 = vadd.f32 0.0, %v705
    %707 = vdwg.mxu0
    %v710 = vcombine.low %v704, %v706
    %v712 = vunpack.c.l.s4 1966171168
    %v713 = vunpack.c.0.s8 %v712
    %v714 = vlaneseq
    %v715 = vshrl.u32 %v714, 7
    %v716 = vsub.s32 %v713, %v715
    %v717 = vrot.slane %v710, %v716
    %v719 = vunpack.c.l.s4 1966171168
    %v720 = vunpack.c.0.s8 %v719
    %v721 = vlaneseq
    %v722 = vshrl.u32 %v721, 7
    %v723 = vsub.s32 %v720, %v722
    %v724 = vrot.slane %v717, %v723
    %v726 = vadd.f32 %v633, %v724
    %v727 = vxor.u32 %v726, 2147483648
    %v728 = vmul.f32 %v727, 1.442695
    %v729 = vpow.pop %v728
    %v730 = vadd.f32 %v729, 1.0
    %v731 = vrcp.pop %v730
    %v732 = vmul.f32 1.0, %v731
    %v734 = vrot.slane %v726, 1
    %v736 = vtanh.pop %v734
    %737 = vrot.lane.b32.xlu0 %v726, 64
    %v738 = vpop.permute.xlu0 %737
    %v739 = vrot.slane %v738, 1
    %v741 = vxor.u32 %v739, 2147483648
    %v742 = vmul.f32 %v741, 1.442695
    %v743 = vpow.pop %v742
    %v744 = vadd.f32 %v743, 1.0
    %v745 = vrcp.pop %v744
    %v746 = vmul.f32 1.0, %v745
    %v747 = vmul.f32 %v732, %v624
    %v748 = vmul.f32 %v732, %v736
    %750 = vrot.lane.b32.xlu0 %v748, 64
    %v751 = vpop.permute.xlu0 %750
    %v753 = vadd.f32 %v747, %v751
    %v754 = vtanh.pop %v753
    %756 = vrot.lane.b32.xlu0 %v754, 64
    %v757 = vpop.permute.xlu0 %756
    %v759 = vmul.f32 %v746, %v757
    %760 = vst.msk [vmem:[#allocation5 + $0x2] sm:$0x1] %vm501, %v759
    %s761 = scalar_lea.vmem [#allocation4], 3
    %v762 = vld [vmem:[%s761] ss:$8 sm:$0x3]
    %v764 = vsel %vm370, %v759, 0
    %766 = vmatprep.subr.mxu0 0.0
    %767 = vmatpush1.msra.mxu0 0.0
    %768 = vmatprep.subr.mxu0 0.0
    %769 = vmatpush1.msra.mxu0 0.0
    %770 = vmatprep.subr.mxu0 0.0
    %771 = vmatpush1.msra.mxu0 0.0
    %772 = vmatprep.subr.mxu0 0.0
    %773 = vmatpush1.msra.mxu0 0.0
    %774 = vmatprep.subr.mxu0 0.0
    %775 = vmatpush1.msra.mxu0 0.0
    %776 = vmatprep.subr.mxu0 0.0
    %777 = vmatpush1.msra.mxu0 0.0
    %778 = vmatprep.subr.mxu0 0.0
    %779 = vmatpush1.msra.mxu0 0.0
    %780 = vmatprep.subr.mxu0 0.0
    %781 = vmatpush1.msra.mxu0 0.0
    %782 = vmatprep.subr.mxu0 %v366
    %783 = vmatpush1.msra.mxu0 %v365
    %784 = vmatprep.subr.mxu0 %v364
    %785 = vmatpush1.msra.mxu0 %v363
    %786 = vmatprep.subr.mxu0 %v362
    %787 = vmatpush1.msra.mxu0 %v361
    %788 = vmatprep.subr.mxu0 %v360
    %789 = vmatpush1.msra.mxu0 %v359
    %790 = vmatprep.subr.mxu0 %v358
    %791 = vmatpush1.msra.mxu0 %v357
    %792 = vmatprep.subr.mxu0 %v356
    %793 = vmatpush1.msra.mxu0 %v355
    %794 = vmatprep.subr.mxu0 %v354
    %795 = vmatpush1.msra.mxu0 %v353
    %796 = vmatprep.subr.mxu0 %v352
    %797 = vmatpush1.msra.mxu0 %v351
    %798 = vmatprep.subr.mxu0 0.0
    %799 = vmatpush2.msra.mxu0 0.0
    %800 = vmatprep.subr.mxu0 0.0
    %801 = vmatpush2.msra.mxu0 0.0
    %802 = vmatprep.subr.mxu0 0.0
    %803 = vmatpush2.msra.mxu0 0.0
    %804 = vmatprep.subr.mxu0 0.0
    %805 = vmatpush2.msra.mxu0 0.0
    %806 = vmatprep.subr.mxu0 0.0
    %807 = vmatpush2.msra.mxu0 0.0
    %808 = vmatprep.subr.mxu0 0.0
    %809 = vmatpush2.msra.mxu0 0.0
    %810 = vmatprep.subr.mxu0 0.0
    %811 = vmatpush2.msra.mxu0 0.0
    %812 = vmatprep.subr.mxu0 0.0
    %813 = vmatpush2.msra.mxu0 0.0
    %814 = vmatprep.subr.mxu0 0.0
    %815 = vmatpush2.msra.mxu0 0.0
    %816 = vmatprep.subr.mxu0 0.0
    %817 = vmatpush2.msra.mxu0 0.0
    %818 = vmatprep.subr.mxu0 0.0
    %819 = vmatpush2.msra.mxu0 0.0
    %820 = vmatprep.subr.mxu0 0.0
    %821 = vmatpush2.msra.mxu0 0.0
    %822 = vmatprep.subr.mxu0 0.0
    %823 = vmatpush2.msra.mxu0 0.0
    %824 = vmatprep.subr.mxu0 0.0
    %825 = vmatpush2.msra.mxu0 0.0
    %826 = vmatprep.subr.mxu0 0.0
    %827 = vmatpush2.msra.mxu0 0.0
    %828 = vmatprep.subr.mxu0 0.0
    %829 = vmatpush2.msra.mxu0 0.0
    %830 = vmatprep.mubr.f32.mxu0 0.0
    %831 = vmatmul.mubr.f32.gmra.mxu0 %v764
    %v832 = vpop.f32.mrf.mxu0
    %v833 = vadd.f32 0.0, %v832
    %v834 = vpop.f32.mrf.mxu0
    %v835 = vadd.f32 0.0, %v834
    %836 = vdwg.mxu0
    %v839 = vcombine.low %v833, %v835
    %v841 = vunpack.c.l.s4 1966171168
    %v842 = vunpack.c.0.s8 %v841
    %v843 = vlaneseq
    %v844 = vshrl.u32 %v843, 7
    %v845 = vsub.s32 %v842, %v844
    %v846 = vrot.slane %v839, %v845
    %v848 = vunpack.c.l.s4 1966171168
    %v849 = vunpack.c.0.s8 %v848
    %v850 = vlaneseq
    %v851 = vshrl.u32 %v850, 7
    %v852 = vsub.s32 %v849, %v851
    %v853 = vrot.slane %v846, %v852
    %v855 = vadd.f32 %v762, %v853
    %v856 = vxor.u32 %v855, 2147483648
    %v857 = vmul.f32 %v856, 1.442695
    %v858 = vpow.pop %v857
    %v859 = vadd.f32 %v858, 1.0
    %v860 = vrcp.pop %v859
    %v861 = vmul.f32 1.0, %v860
    %v863 = vrot.slane %v855, 1
    %v865 = vtanh.pop %v863
    %866 = vrot.lane.b32.xlu0 %v855, 64
    %v867 = vpop.permute.xlu0 %866
    %v868 = vrot.slane %v867, 1
    %v870 = vxor.u32 %v868, 2147483648
    %v871 = vmul.f32 %v870, 1.442695
    %v872 = vpow.pop %v871
    %v873 = vadd.f32 %v872, 1.0
    %v874 = vrcp.pop %v873
    %v875 = vmul.f32 1.0, %v874
    %v876 = vmul.f32 %v861, %v753
    %v877 = vmul.f32 %v861, %v865
    %879 = vrot.lane.b32.xlu0 %v877, 64
    %v880 = vpop.permute.xlu0 %879
    %v882 = vadd.f32 %v876, %v880
    %v883 = vtanh.pop %v882
    %885 = vrot.lane.b32.xlu0 %v883, 64
    %v886 = vpop.permute.xlu0 %885
    %v888 = vmul.f32 %v875, %v886
    %889 = vst.msk [vmem:[#allocation5 + $0x3] sm:$0x1] %vm501, %v888
    %s890 = scalar_lea.vmem [#allocation4], 4
    %v891 = vld [vmem:[%s890] ss:$8 sm:$0x3]
    %v893 = vsel %vm370, %v888, 0
    %895 = vmatprep.subr.mxu0 0.0
    %896 = vmatpush1.msra.mxu0 0.0
    %897 = vmatprep.subr.mxu0 0.0
    %898 = vmatpush1.msra.mxu0 0.0
    %899 = vmatprep.subr.mxu0 0.0
    %900 = vmatpush1.msra.mxu0 0.0
    %901 = vmatprep.subr.mxu0 0.0
    %902 = vmatpush1.msra.mxu0 0.0
    %903 = vmatprep.subr.mxu0 0.0
    %904 = vmatpush1.msra.mxu0 0.0
    %905 = vmatprep.subr.mxu0 0.0
    %906 = vmatpush1.msra.mxu0 0.0
    %907 = vmatprep.subr.mxu0 0.0
    %908 = vmatpush1.msra.mxu0 0.0
    %909 = vmatprep.subr.mxu0 0.0
    %910 = vmatpush1.msra.mxu0 0.0
    %911 = vmatprep.subr.mxu0 %v366
    %912 = vmatpush1.msra.mxu0 %v365
    %913 = vmatprep.subr.mxu0 %v364
    %914 = vmatpush1.msra.mxu0 %v363
    %915 = vmatprep.subr.mxu0 %v362
    %916 = vmatpush1.msra.mxu0 %v361
    %917 = vmatprep.subr.mxu0 %v360
    %918 = vmatpush1.msra.mxu0 %v359
    %919 = vmatprep.subr.mxu0 %v358
    %920 = vmatpush1.msra.mxu0 %v357
    %921 = vmatprep.subr.mxu0 %v356
    %922 = vmatpush1.msra.mxu0 %v355
    %923 = vmatprep.subr.mxu0 %v354
    %924 = vmatpush1.msra.mxu0 %v353
    %925 = vmatprep.subr.mxu0 %v352
    %926 = vmatpush1.msra.mxu0 %v351
    %927 = vmatprep.subr.mxu0 0.0
    %928 = vmatpush2.msra.mxu0 0.0
    %929 = vmatprep.subr.mxu0 0.0
    %930 = vmatpush2.msra.mxu0 0.0
    %931 = vmatprep.subr.mxu0 0.0
    %932 = vmatpush2.msra.mxu0 0.0
    %933 = vmatprep.subr.mxu0 0.0
    %934 = vmatpush2.msra.mxu0 0.0
    %935 = vmatprep.subr.mxu0 0.0
    %936 = vmatpush2.msra.mxu0 0.0
    %937 = vmatprep.subr.mxu0 0.0
    %938 = vmatpush2.msra.mxu0 0.0
    %939 = vmatprep.subr.mxu0 0.0
    %940 = vmatpush2.msra.mxu0 0.0
    %941 = vmatprep.subr.mxu0 0.0
    %942 = vmatpush2.msra.mxu0 0.0
    %943 = vmatprep.subr.mxu0 0.0
    %944 = vmatpush2.msra.mxu0 0.0
    %945 = vmatprep.subr.mxu0 0.0
    %946 = vmatpush2.msra.mxu0 0.0
    %947 = vmatprep.subr.mxu0 0.0
    %948 = vmatpush2.msra.mxu0 0.0
    %949 = vmatprep.subr.mxu0 0.0
    %950 = vmatpush2.msra.mxu0 0.0
    %951 = vmatprep.subr.mxu0 0.0
    %952 = vmatpush2.msra.mxu0 0.0
    %953 = vmatprep.subr.mxu0 0.0
    %954 = vmatpush2.msra.mxu0 0.0
    %955 = vmatprep.subr.mxu0 0.0
    %956 = vmatpush2.msra.mxu0 0.0
    %957 = vmatprep.subr.mxu0 0.0
    %958 = vmatpush2.msra.mxu0 0.0
    %959 = vmatprep.mubr.f32.mxu0 0.0
    %960 = vmatmul.mubr.f32.gmra.mxu0 %v893
    %v961 = vpop.f32.mrf.mxu0
    %v962 = vadd.f32 0.0, %v961
    %v963 = vpop.f32.mrf.mxu0
    %v964 = vadd.f32 0.0, %v963
    %965 = vdwg.mxu0
    %v968 = vcombine.low %v962, %v964
    %v970 = vunpack.c.l.s4 1966171168
    %v971 = vunpack.c.0.s8 %v970
    %v972 = vlaneseq
    %v973 = vshrl.u32 %v972, 7
    %v974 = vsub.s32 %v971, %v973
    %v975 = vrot.slane %v968, %v974
    %v977 = vunpack.c.l.s4 1966171168
    %v978 = vunpack.c.0.s8 %v977
    %v979 = vlaneseq
    %v980 = vshrl.u32 %v979, 7
    %v981 = vsub.s32 %v978, %v980
    %v982 = vrot.slane %v975, %v981
    %v984 = vadd.f32 %v891, %v982
    %v985 = vxor.u32 %v984, 2147483648
    %v986 = vmul.f32 %v985, 1.442695
    %v987 = vpow.pop %v986
    %v988 = vadd.f32 %v987, 1.0
    %v989 = vrcp.pop %v988
    %v990 = vmul.f32 1.0, %v989
    %v992 = vrot.slane %v984, 1
    %v994 = vtanh.pop %v992
    %995 = vrot.lane.b32.xlu0 %v984, 64
    %v996 = vpop.permute.xlu0 %995
    %v997 = vrot.slane %v996, 1
    %v999 = vxor.u32 %v997, 2147483648
    %v1000 = vmul.f32 %v999, 1.442695
    %v1001 = vpow.pop %v1000
    %v1002 = vadd.f32 %v1001, 1.0
    %v1003 = vrcp.pop %v1002
    %v1004 = vmul.f32 1.0, %v1003
    %v1005 = vmul.f32 %v990, %v882
    %v1006 = vmul.f32 %v990, %v994
    %1008 = vrot.lane.b32.xlu0 %v1006, 64
    %v1009 = vpop.permute.xlu0 %1008
    %v1011 = vadd.f32 %v1005, %v1009
    %v1012 = vtanh.pop %v1011
    %1014 = vrot.lane.b32.xlu0 %v1012, 64
    %v1015 = vpop.permute.xlu0 %1014
    %v1017 = vmul.f32 %v1004, %v1015
    %1018 = vst.msk [vmem:[#allocation5 + $0x4] sm:$0x1] %vm501, %v1017
    %s1019 = scalar_lea.vmem [#allocation4], 5
    %v1020 = vld [vmem:[%s1019] ss:$8 sm:$0x3]
    %v1022 = vsel %vm370, %v1017, 0
    %1024 = vmatprep.subr.mxu0 0.0
    %1025 = vmatpush1.msra.mxu0 0.0
    %1026 = vmatprep.subr.mxu0 0.0
    %1027 = vmatpush1.msra.mxu0 0.0
    %1028 = vmatprep.subr.mxu0 0.0
    %1029 = vmatpush1.msra.mxu0 0.0
    %1030 = vmatprep.subr.mxu0 0.0
    %1031 = vmatpush1.msra.mxu0 0.0
    %1032 = vmatprep.subr.mxu0 0.0
    %1033 = vmatpush1.msra.mxu0 0.0
    %1034 = vmatprep.subr.mxu0 0.0
    %1035 = vmatpush1.msra.mxu0 0.0
    %1036 = vmatprep.subr.mxu0 0.0
    %1037 = vmatpush1.msra.mxu0 0.0
    %1038 = vmatprep.subr.mxu0 0.0
    %1039 = vmatpush1.msra.mxu0 0.0
    %1040 = vmatprep.subr.mxu0 %v366
    %1041 = vmatpush1.msra.mxu0 %v365
    %1042 = vmatprep.subr.mxu0 %v364
    %1043 = vmatpush1.msra.mxu0 %v363
    %1044 = vmatprep.subr.mxu0 %v362
    %1045 = vmatpush1.msra.mxu0 %v361
    %1046 = vmatprep.subr.mxu0 %v360
    %1047 = vmatpush1.msra.mxu0 %v359
    %1048 = vmatprep.subr.mxu0 %v358
    %1049 = vmatpush1.msra.mxu0 %v357
    %1050 = vmatprep.subr.mxu0 %v356
    %1051 = vmatpush1.msra.mxu0 %v355
    %1052 = vmatprep.subr.mxu0 %v354
    %1053 = vmatpush1.msra.mxu0 %v353
    %1054 = vmatprep.subr.mxu0 %v352
    %1055 = vmatpush1.msra.mxu0 %v351
    %1056 = vmatprep.subr.mxu0 0.0
    %1057 = vmatpush2.msra.mxu0 0.0
    %1058 = vmatprep.subr.mxu0 0.0
    %1059 = vmatpush2.msra.mxu0 0.0
    %1060 = vmatprep.subr.mxu0 0.0
    %1061 = vmatpush2.msra.mxu0 0.0
    %1062 = vmatprep.subr.mxu0 0.0
    %1063 = vmatpush2.msra.mxu0 0.0
    %1064 = vmatprep.subr.mxu0 0.0
    %1065 = vmatpush2.msra.mxu0 0.0
    %1066 = vmatprep.subr.mxu0 0.0
    %1067 = vmatpush2.msra.mxu0 0.0
    %1068 = vmatprep.subr.mxu0 0.0
    %1069 = vmatpush2.msra.mxu0 0.0
    %1070 = vmatprep.subr.mxu0 0.0
    %1071 = vmatpush2.msra.mxu0 0.0
    %1072 = vmatprep.subr.mxu0 0.0
    %1073 = vmatpush2.msra.mxu0 0.0
    %1074 = vmatprep.subr.mxu0 0.0
    %1075 = vmatpush2.msra.mxu0 0.0
    %1076 = vmatprep.subr.mxu0 0.0
    %1077 = vmatpush2.msra.mxu0 0.0
    %1078 = vmatprep.subr.mxu0 0.0
    %1079 = vmatpush2.msra.mxu0 0.0
    %1080 = vmatprep.subr.mxu0 0.0
    %1081 = vmatpush2.msra.mxu0 0.0
    %1082 = vmatprep.subr.mxu0 0.0
    %1083 = vmatpush2.msra.mxu0 0.0
    %1084 = vmatprep.subr.mxu0 0.0
    %1085 = vmatpush2.msra.mxu0 0.0
    %1086 = vmatprep.subr.mxu0 0.0
    %1087 = vmatpush2.msra.mxu0 0.0
    %1088 = vmatprep.mubr.f32.mxu0 0.0
    %1089 = vmatmul.mubr.f32.gmra.mxu0 %v1022
    %v1090 = vpop.f32.mrf.mxu0
    %v1091 = vadd.f32 0.0, %v1090
    %v1092 = vpop.f32.mrf.mxu0
    %v1093 = vadd.f32 0.0, %v1092
    %1094 = vdwg.mxu0
    %v1097 = vcombine.low %v1091, %v1093
    %v1099 = vunpack.c.l.s4 1966171168
    %v1100 = vunpack.c.0.s8 %v1099
    %v1101 = vlaneseq
    %v1102 = vshrl.u32 %v1101, 7
    %v1103 = vsub.s32 %v1100, %v1102
    %v1104 = vrot.slane %v1097, %v1103
    %v1106 = vunpack.c.l.s4 1966171168
    %v1107 = vunpack.c.0.s8 %v1106
    %v1108 = vlaneseq
    %v1109 = vshrl.u32 %v1108, 7
    %v1110 = vsub.s32 %v1107, %v1109
    %v1111 = vrot.slane %v1104, %v1110
    %v1113 = vadd.f32 %v1020, %v1111
    %v1114 = vxor.u32 %v1113, 2147483648
    %v1115 = vmul.f32 %v1114, 1.442695
    %v1116 = vpow.pop %v1115
    %v1117 = vadd.f32 %v1116, 1.0
    %v1118 = vrcp.pop %v1117
    %v1119 = vmul.f32 1.0, %v1118
    %v1121 = vrot.slane %v1113, 1
    %v1123 = vtanh.pop %v1121
    %1124 = vrot.lane.b32.xlu0 %v1113, 64
    %v1125 = vpop.permute.xlu0 %1124
    %v1126 = vrot.slane %v1125, 1
    %v1128 = vxor.u32 %v1126, 2147483648
    %v1129 = vmul.f32 %v1128, 1.442695
    %v1130 = vpow.pop %v1129
    %v1131 = vadd.f32 %v1130, 1.0
    %v1132 = vrcp.pop %v1131
    %v1133 = vmul.f32 1.0, %v1132
    %v1134 = vmul.f32 %v1119, %v1011
    %v1135 = vmul.f32 %v1119, %v1123
    %1137 = vrot.lane.b32.xlu0 %v1135, 64
    %v1138 = vpop.permute.xlu0 %1137
    %v1140 = vadd.f32 %v1134, %v1138
    %v1141 = vtanh.pop %v1140
    %1143 = vrot.lane.b32.xlu0 %v1141, 64
    %v1144 = vpop.permute.xlu0 %1143
    %v1146 = vmul.f32 %v1133, %v1144
    %1147 = vst.msk [vmem:[#allocation5 + $0x5] sm:$0x1] %vm501, %v1146
    %s1148 = scalar_lea.vmem [#allocation4], 6
    %v1149 = vld [vmem:[%s1148] ss:$8 sm:$0x3]
    %v1151 = vsel %vm370, %v1146, 0
    %1153 = vmatprep.subr.mxu0 0.0
    %1154 = vmatpush1.msra.mxu0 0.0
    %1155 = vmatprep.subr.mxu0 0.0
    %1156 = vmatpush1.msra.mxu0 0.0
    %1157 = vmatprep.subr.mxu0 0.0
    %1158 = vmatpush1.msra.mxu0 0.0
    %1159 = vmatprep.subr.mxu0 0.0
    %1160 = vmatpush1.msra.mxu0 0.0
    %1161 = vmatprep.subr.mxu0 0.0
    %1162 = vmatpush1.msra.mxu0 0.0
    %1163 = vmatprep.subr.mxu0 0.0
    %1164 = vmatpush1.msra.mxu0 0.0
    %1165 = vmatprep.subr.mxu0 0.0
    %1166 = vmatpush1.msra.mxu0 0.0
    %1167 = vmatprep.subr.mxu0 0.0
    %1168 = vmatpush1.msra.mxu0 0.0
    %1169 = vmatprep.subr.mxu0 %v366
    %1170 = vmatpush1.msra.mxu0 %v365
    %1171 = vmatprep.subr.mxu0 %v364
    %1172 = vmatpush1.msra.mxu0 %v363
    %1173 = vmatprep.subr.mxu0 %v362
    %1174 = vmatpush1.msra.mxu0 %v361
    %1175 = vmatprep.subr.mxu0 %v360
    %1176 = vmatpush1.msra.mxu0 %v359
    %1177 = vmatprep.subr.mxu0 %v358
    %1178 = vmatpush1.msra.mxu0 %v357
    %1179 = vmatprep.subr.mxu0 %v356
    %1180 = vmatpush1.msra.mxu0 %v355
    %1181 = vmatprep.subr.mxu0 %v354
    %1182 = vmatpush1.msra.mxu0 %v353
    %1183 = vmatprep.subr.mxu0 %v352
    %1184 = vmatpush1.msra.mxu0 %v351
    %1185 = vmatprep.subr.mxu0 0.0
    %1186 = vmatpush2.msra.mxu0 0.0
    %1187 = vmatprep.subr.mxu0 0.0
    %1188 = vmatpush2.msra.mxu0 0.0
    %1189 = vmatprep.subr.mxu0 0.0
    %1190 = vmatpush2.msra.mxu0 0.0
    %1191 = vmatprep.subr.mxu0 0.0
    %1192 = vmatpush2.msra.mxu0 0.0
    %1193 = vmatprep.subr.mxu0 0.0
    %1194 = vmatpush2.msra.mxu0 0.0
    %1195 = vmatprep.subr.mxu0 0.0
    %1196 = vmatpush2.msra.mxu0 0.0
    %1197 = vmatprep.subr.mxu0 0.0
    %1198 = vmatpush2.msra.mxu0 0.0
    %1199 = vmatprep.subr.mxu0 0.0
    %1200 = vmatpush2.msra.mxu0 0.0
    %1201 = vmatprep.subr.mxu0 0.0
    %1202 = vmatpush2.msra.mxu0 0.0
    %1203 = vmatprep.subr.mxu0 0.0
    %1204 = vmatpush2.msra.mxu0 0.0
    %1205 = vmatprep.subr.mxu0 0.0
    %1206 = vmatpush2.msra.mxu0 0.0
    %1207 = vmatprep.subr.mxu0 0.0
    %1208 = vmatpush2.msra.mxu0 0.0
    %1209 = vmatprep.subr.mxu0 0.0
    %1210 = vmatpush2.msra.mxu0 0.0
    %1211 = vmatprep.subr.mxu0 0.0
    %1212 = vmatpush2.msra.mxu0 0.0
    %1213 = vmatprep.subr.mxu0 0.0
    %1214 = vmatpush2.msra.mxu0 0.0
    %1215 = vmatprep.subr.mxu0 0.0
    %1216 = vmatpush2.msra.mxu0 0.0
    %1217 = vmatprep.mubr.f32.mxu0 0.0
    %1218 = vmatmul.mubr.f32.gmra.mxu0 %v1151
    %v1219 = vpop.f32.mrf.mxu0
    %v1220 = vadd.f32 0.0, %v1219
    %v1221 = vpop.f32.mrf.mxu0
    %v1222 = vadd.f32 0.0, %v1221
    %1223 = vdwg.mxu0
    %v1226 = vcombine.low %v1220, %v1222
    %v1228 = vunpack.c.l.s4 1966171168
    %v1229 = vunpack.c.0.s8 %v1228
    %v1230 = vlaneseq
    %v1231 = vshrl.u32 %v1230, 7
    %v1232 = vsub.s32 %v1229, %v1231
    %v1233 = vrot.slane %v1226, %v1232
    %v1235 = vunpack.c.l.s4 1966171168
    %v1236 = vunpack.c.0.s8 %v1235
    %v1237 = vlaneseq
    %v1238 = vshrl.u32 %v1237, 7
    %v1239 = vsub.s32 %v1236, %v1238
    %v1240 = vrot.slane %v1233, %v1239
    %v1242 = vadd.f32 %v1149, %v1240
    %v1243 = vxor.u32 %v1242, 2147483648
    %v1244 = vmul.f32 %v1243, 1.442695
    %v1245 = vpow.pop %v1244
    %v1246 = vadd.f32 %v1245, 1.0
    %v1247 = vrcp.pop %v1246
    %v1248 = vmul.f32 1.0, %v1247
    %v1250 = vrot.slane %v1242, 1
    %v1252 = vtanh.pop %v1250
    %1253 = vrot.lane.b32.xlu0 %v1242, 64
    %v1254 = vpop.permute.xlu0 %1253
    %v1255 = vrot.slane %v1254, 1
    %v1257 = vxor.u32 %v1255, 2147483648
    %v1258 = vmul.f32 %v1257, 1.442695
    %v1259 = vpow.pop %v1258
    %v1260 = vadd.f32 %v1259, 1.0
    %v1261 = vrcp.pop %v1260
    %v1262 = vmul.f32 1.0, %v1261
    %v1263 = vmul.f32 %v1248, %v1140
    %v1264 = vmul.f32 %v1248, %v1252
    %1266 = vrot.lane.b32.xlu0 %v1264, 64
    %v1267 = vpop.permute.xlu0 %1266
    %v1269 = vadd.f32 %v1263, %v1267
    %v1270 = vtanh.pop %v1269
    %1272 = vrot.lane.b32.xlu0 %v1270, 64
    %v1273 = vpop.permute.xlu0 %1272
    %v1275 = vmul.f32 %v1262, %v1273
    %1276 = vst.msk [vmem:[#allocation5 + $0x6] sm:$0x1] %vm501, %v1275
    %s1277 = scalar_lea.vmem [#allocation4], 7
    %v1278 = vld [vmem:[%s1277] ss:$8 sm:$0x3]
    %v1280 = vsel %vm370, %v1275, 0
    %1282 = vmatprep.subr.mxu0 0.0
    %1283 = vmatpush1.msra.mxu0 0.0
    %1284 = vmatprep.subr.mxu0 0.0
    %1285 = vmatpush1.msra.mxu0 0.0
    %1286 = vmatprep.subr.mxu0 0.0
    %1287 = vmatpush1.msra.mxu0 0.0
    %1288 = vmatprep.subr.mxu0 0.0
    %1289 = vmatpush1.msra.mxu0 0.0
    %1290 = vmatprep.subr.mxu0 0.0
    %1291 = vmatpush1.msra.mxu0 0.0
    %1292 = vmatprep.subr.mxu0 0.0
    %1293 = vmatpush1.msra.mxu0 0.0
    %1294 = vmatprep.subr.mxu0 0.0
    %1295 = vmatpush1.msra.mxu0 0.0
    %1296 = vmatprep.subr.mxu0 0.0
    %1297 = vmatpush1.msra.mxu0 0.0
    %1298 = vmatprep.subr.mxu0 %v366
    %1299 = vmatpush1.msra.mxu0 %v365
    %1300 = vmatprep.subr.mxu0 %v364
    %1301 = vmatpush1.msra.mxu0 %v363
    %1302 = vmatprep.subr.mxu0 %v362
    %1303 = vmatpush1.msra.mxu0 %v361
    %1304 = vmatprep.subr.mxu0 %v360
    %1305 = vmatpush1.msra.mxu0 %v359
    %1306 = vmatprep.subr.mxu0 %v358
    %1307 = vmatpush1.msra.mxu0 %v357
    %1308 = vmatprep.subr.mxu0 %v356
    %1309 = vmatpush1.msra.mxu0 %v355
    %1310 = vmatprep.subr.mxu0 %v354
    %1311 = vmatpush1.msra.mxu0 %v353
    %1312 = vmatprep.subr.mxu0 %v352
    %1313 = vmatpush1.msra.mxu0 %v351
    %1314 = vmatprep.subr.mxu0 0.0
    %1315 = vmatpush2.msra.mxu0 0.0
    %1316 = vmatprep.subr.mxu0 0.0
    %1317 = vmatpush2.msra.mxu0 0.0
    %1318 = vmatprep.subr.mxu0 0.0
    %1319 = vmatpush2.msra.mxu0 0.0
    %1320 = vmatprep.subr.mxu0 0.0
    %1321 = vmatpush2.msra.mxu0 0.0
    %1322 = vmatprep.subr.mxu0 0.0
    %1323 = vmatpush2.msra.mxu0 0.0
    %1324 = vmatprep.subr.mxu0 0.0
    %1325 = vmatpush2.msra.mxu0 0.0
    %1326 = vmatprep.subr.mxu0 0.0
    %1327 = vmatpush2.msra.mxu0 0.0
    %1328 = vmatprep.subr.mxu0 0.0
    %1329 = vmatpush2.msra.mxu0 0.0
    %1330 = vmatprep.subr.mxu0 0.0
    %1331 = vmatpush2.msra.mxu0 0.0
    %1332 = vmatprep.subr.mxu0 0.0
    %1333 = vmatpush2.msra.mxu0 0.0
    %1334 = vmatprep.subr.mxu0 0.0
    %1335 = vmatpush2.msra.mxu0 0.0
    %1336 = vmatprep.subr.mxu0 0.0
    %1337 = vmatpush2.msra.mxu0 0.0
    %1338 = vmatprep.subr.mxu0 0.0
    %1339 = vmatpush2.msra.mxu0 0.0
    %1340 = vmatprep.subr.mxu0 0.0
    %1341 = vmatpush2.msra.mxu0 0.0
    %1342 = vmatprep.subr.mxu0 0.0
    %1343 = vmatpush2.msra.mxu0 0.0
    %1344 = vmatprep.subr.mxu0 0.0
    %1345 = vmatpush2.msra.mxu0 0.0
    %1346 = vmatprep.mubr.f32.mxu0 0.0
    %1347 = vmatmul.mubr.f32.gmra.mxu0 %v1280
    %v1348 = vpop.f32.mrf.mxu0
    %v1349 = vadd.f32 0.0, %v1348
    %v1350 = vpop.f32.mrf.mxu0
    %v1351 = vadd.f32 0.0, %v1350
    %1352 = vdwg.mxu0
    %v1355 = vcombine.low %v1349, %v1351
    %v1357 = vunpack.c.l.s4 1966171168
    %v1358 = vunpack.c.0.s8 %v1357
    %v1359 = vlaneseq
    %v1360 = vshrl.u32 %v1359, 7
    %v1361 = vsub.s32 %v1358, %v1360
    %v1362 = vrot.slane %v1355, %v1361
    %v1364 = vunpack.c.l.s4 1966171168
    %v1365 = vunpack.c.0.s8 %v1364
    %v1366 = vlaneseq
    %v1367 = vshrl.u32 %v1366, 7
    %v1368 = vsub.s32 %v1365, %v1367
    %v1369 = vrot.slane %v1362, %v1368
    %v1371 = vadd.f32 %v1278, %v1369
    %v1372 = vxor.u32 %v1371, 2147483648
    %v1373 = vmul.f32 %v1372, 1.442695
    %v1374 = vpow.pop %v1373
    %v1375 = vadd.f32 %v1374, 1.0
    %v1376 = vrcp.pop %v1375
    %v1377 = vmul.f32 1.0, %v1376
    %v1379 = vrot.slane %v1371, 1
    %v1381 = vtanh.pop %v1379
    %1382 = vrot.lane.b32.xlu0 %v1371, 64
    %v1383 = vpop.permute.xlu0 %1382
    %v1384 = vrot.slane %v1383, 1
    %v1386 = vxor.u32 %v1384, 2147483648
    %v1387 = vmul.f32 %v1386, 1.442695
    %v1388 = vpow.pop %v1387
    %v1389 = vadd.f32 %v1388, 1.0
    %v1390 = vrcp.pop %v1389
    %v1391 = vmul.f32 1.0, %v1390
    %v1392 = vmul.f32 %v1377, %v1269
    %v1393 = vmul.f32 %v1377, %v1381
    %1395 = vrot.lane.b32.xlu0 %v1393, 64
    %v1396 = vpop.permute.xlu0 %1395
    %v1398 = vadd.f32 %v1392, %v1396
    %v1399 = vtanh.pop %v1398
    %1401 = vrot.lane.b32.xlu0 %v1399, 64
    %v1402 = vpop.permute.xlu0 %1401
    %v1404 = vmul.f32 %v1391, %v1402
    %1405 = vst.msk [vmem:[#allocation5 + $0x7] sm:$0x1] %vm501, %v1404
    %v1406 = vld [vmem:[#allocation5] sm:$0xff]
    %1407 = vst.msk [vmem:[#allocation9] sm:$0xff] %vm370, %v1406
    %1409 = vrot.lane.b32.xlu0 %v252, 64
    %v1410 = vpop.permute.xlu0 %1409
    %vm1412 = vcmask 556544
    %1413 = vst.msk [vmem:[#allocation9] sm:$0xff] %vm1412, %v1410
    %1414 = vst.msk [vmem:[#allocation2] sm:$0x1] %vm501, %v1404
    %v1416 = vlaneseq
    %v1417 = vshrl.u32 %v1416, 7
    %v1418 = vsub.s32 0, %v1417
    %v1419 = vrot.slane %v1398, %v1418
    %1420 = vrot.lane.b32.xlu0 %v1419, 64
    %v1421 = vpop.permute.xlu0 %1420
    %1423 = vst.msk [vmem:[#allocation3] sm:$0x1] %vm501, %v1421
    %1424 = vst.msk [vmem:[#allocation10] sm:$0x1] %vm501, %v1404
    %1425 = vst.msk [vmem:[#allocation12] sm:$0x1] %vm501, %v1421
    // Predicated region
    $region54: #{tpu_custom_call.1} parent=1 // pred_check
      _
    $region55: #{tpu_custom_call.1} parent=1 // pred_check_branch
      %1427 = sbr.rel (0) target = $region57
    $region56: #{tpu_custom_call.1} parent=1 // pred_region
      %s1429 = ssub.s32 128, 128
      %1430 = vsyncadd [#allocation8], %s1429
      %s1432 = sshll.u32 [#allocation9], 4
      %s1433 = int_to_ptr.vmem [resolvable:$true] %s1432
      %1435 = dma.vmem_to_hbm [thread:$0]  %s1433, 128, %s11, [#allocation8]
    $region57: #{tpu_custom_call.1} parent=1 // pred_fallthru
      _
    // Predicated region
    $region58: #{tpu_custom_call.1} parent=1 // pred_check
      _
    $region59: #{tpu_custom_call.1} parent=1 // pred_check_branch
      %1437 = sbr.rel (0) target = $region61
    $region60: #{tpu_custom_call.1} parent=1 // pred_region
      %s1439 = ssub.s32 16, 16
      %1440 = vsyncadd [#allocation11], %s1439
      %s1442 = sshll.u32 [#allocation10], 4
      %s1443 = int_to_ptr.vmem [resolvable:$true] %s1442
      %1445 = dma.vmem_to_hbm [thread:$0]  %s1443, 16, %s12, [#allocation11]
    $region61: #{tpu_custom_call.1} parent=1 // pred_fallthru
      _
    // Predicated region
    $region62: #{tpu_custom_call.1} parent=1 // pred_check
      _
    $region63: #{tpu_custom_call.1} parent=1 // pred_check_branch
      %1447 = sbr.rel (0) target = $region65
    $region64: #{tpu_custom_call.1} parent=1 // pred_region
      %s1449 = ssub.s32 16, 16
      %1450 = vsyncadd [#allocation11], %s1449
      %s1452 = sshll.u32 [#allocation12], 4
      %s1453 = int_to_ptr.vmem [resolvable:$true] %s1452
      %1455 = dma.vmem_to_hbm [thread:$0]  %s1453, 16, %s13, [#allocation11]
    $region65: #{tpu_custom_call.1} parent=1 // pred_fallthru
      _
    // Predicated region
    $region66: #{tpu_custom_call.1} parent=1 // pred_check
      _
    $region67: #{tpu_custom_call.1} parent=1 // pred_check_branch
      %1457 = sbr.rel (0) target = $region69
    $region68: #{tpu_custom_call.1} parent=1 // pred_region
      %1458 = dma.done [#allocation8], 128
    $region69: #{tpu_custom_call.1} parent=1 // pred_fallthru
      _
    // Predicated region
    $region70: #{tpu_custom_call.1} parent=1 // pred_check
      _
    $region71: #{tpu_custom_call.1} parent=1 // pred_check_branch
      %1460 = sbr.rel (0) target = $region73
    $region72: #{tpu_custom_call.1} parent=1 // pred_region
      %1461 = dma.done [#allocation11], 16
    $region73: #{tpu_custom_call.1} parent=1 // pred_fallthru
      _
    // Predicated region
    $region74: #{tpu_custom_call.1} parent=1 // pred_check
      _
    $region75: #{tpu_custom_call.1} parent=1 // pred_check_branch
      %1463 = sbr.rel (0) target = $region77
    $region76: #{tpu_custom_call.1} parent=1 // pred_region
      %1464 = dma.done [#allocation11], 16
    $region77: #{tpu_custom_call.1} parent=1 // pred_fallthru
      _
    %1465 = vsyncpa [#allocation7], 1
    %1466 = vsyncpa [#allocation8], 1
    %1467 = vsyncpa [#allocation11], 1

</llo_original>
